<compile_context>
chip_gen: v7x
topology: tpu7x:2x2x1
jax: 0.10.0
libtpu: 0.0.40
codegen_flags: <defaults>
</compile_context>

<pallas_src>
import jax
import jax.numpy as jnp
from jax import lax
from jax.experimental import pallas as pl
from jax.experimental.pallas import tpu as pltpu

# ------------------------------- configuration -------------------------------------
B, C, H, W = 2, 32, 8, 8            # NCHW input, C == embedding_dim
EMBEDDING_DIM = C                    # 32
CODEBOOK_DIM = 8                     # != embedding_dim -> projections active
NUM_EMBEDDINGS = 16                  # K
LN_EPS = 1e-5
# Spatial tokens per grid step.  For real inputs keep this large (512-4096 tokens reaches
# ~85%+ of HBM roofline; per-step overhead ~0.35us); it is clamped to HW so the grid always
# has >= B parallel steps (keeps both v7x TensorCores busy even at toy sizes).
SPATIAL_TILE = 2048


# --------------------------------- Pallas kernel ------------------------------------
def vq_kernel(
    x_ref,                       # (1, D, T)   raw NCHW slab for one (batch, spatial tile)
    w_in1_ref, b_in1_ref,        # (D, D), (1, D)
    w_in2_ref, b_in2_ref,        # (D, Dc), (1, Dc)
    g_in_ref, be_in_ref,         # (1, Dc), (1, Dc)    LayerNorm(codebook_dim)
    emb_ref, e2_ref,             # (K, Dc), (1, K)     codebook, precomputed ||e||^2
    w_out1_ref, b_out1_ref,      # (Dc, D), (1, D)
    w_out2_ref, b_out2_ref,      # (D, D), (1, D)
    g_out_ref, be_out_ref,       # (1, D), (1, D)      LayerNorm(embedding_dim)
    quant_ref,                   # (1, T, D)   out: quantized + project_out + norm_out
    idx_ref,                     # (1, 1, T)   out: int32 encoding indices, lane-dense
):
    # ---- fused NCHW -> token-major transpose (wrapper no longer permutes in HBM) ----
    x = jnp.transpose(x_ref[0])                                   # (T, D) f32

    # ---- project_in: Linear -> ReLU -> Linear ----
    h = jnp.dot(x, w_in1_ref[...], preferred_element_type=jnp.float32) + b_in1_ref[...]
    h = jnp.maximum(h, 0.0)
    f = jnp.dot(h, w_in2_ref[...], preferred_element_type=jnp.float32) + b_in2_ref[...]

    # ---- norm_in: LayerNorm over codebook_dim ----
    mu = jnp.mean(f, axis=-1, keepdims=True)
    var = jnp.mean((f - mu) * (f - mu), axis=-1, keepdims=True)
    f = (f - mu) * lax.rsqrt(var + LN_EPS)
    f = f * g_in_ref[...] + be_in_ref[...]                        # (T, Dc)

    # ---- nearest codebook entry ----
    # argmin(||f||^2 + ||e||^2 - 2 f.e) == argmin(||e||^2 - 2 f.e): the per-token ||f||^2
    # is constant along the K axis, so it is dropped (distances are never an output).
    emb = emb_ref[...]                                            # (K, Dc)
    cross = lax.dot_general(f, emb, (((1,), (1,)), ((), ())),
                            preferred_element_type=jnp.float32)   # (T, K) = f @ emb^T
    d = e2_ref[...] - 2.0 * cross                                 # (T, K)

    col = lax.broadcasted_iota(jnp.int32, d.shape, 1)             # (T, K)
    dmin = jnp.min(d, axis=-1, keepdims=True)                     # (T, 1)
    big = jnp.int32(2 ** 30)
    idx_col = jnp.min(jnp.where(d <= dmin, col, big),
                      axis=-1, keepdims=True)                     # (T, 1) first-index ties

    # ---- one-hot encodings + quantize (encodings @ codebook) ----
    onehot = (col == idx_col).astype(jnp.float32)                 # (T, K)
    q = jnp.dot(onehot, emb, preferred_element_type=jnp.float32)  # (T, Dc)

    # ---- project_out: Linear -> ReLU -> Linear ----
    h2 = jnp.dot(q, w_out1_ref[...], preferred_element_type=jnp.float32) + b_out1_ref[...]
    h2 = jnp.maximum(h2, 0.0)
    q2 = jnp.dot(h2, w_out2_ref[...], preferred_element_type=jnp.float32) + b_out2_ref[...]

    # ---- norm_out: LayerNorm over embedding_dim ----
    mu2 = jnp.mean(q2, axis=-1, keepdims=True)
    var2 = jnp.mean((q2 - mu2) * (q2 - mu2), axis=-1, keepdims=True)
    q2 = (q2 - mu2) * lax.rsqrt(var2 + LN_EPS)
    q2 = q2 * g_out_ref[...] + be_out_ref[...]                    # (T, D)

    quant_ref[0] = q2

    # ---- lane-dense index store ----
    # Contract the one-hot with a K-iota on the (idle) MXU so the indices come out laid
    # along the lane axis -> unmasked vector stores instead of a (T, 1) 1-lane vst.msk.
    k_rows = lax.broadcasted_iota(jnp.int32, (8, onehot.shape[-1]), 1).astype(jnp.float32)
    idx_rows = lax.dot_general(k_rows, onehot, (((1,), (1,)), ((), ())),
                               preferred_element_type=jnp.float32)   # (8, T), rows identical
    idx_ref[0] = idx_rows[0:1, :].astype(jnp.int32)               # (1, T), exact small ints


# ------------------------------------ wrapper ----------------------------------------
@jax.jit
def base_vq_forward(x_nchw, params):
    """x_nchw: (B, C, H, W) float32.
    Returns (quantized (B,HW,D), encoding_indices (N,1) int32, encodings (B,HW,K))."""
    b, c, h, w = x_nchw.shape
    d, dc, k = EMBEDDING_DIM, CODEBOOK_DIM, NUM_EMBEDDINGS
    assert c == d
    hw = h * w
    tsp = min(SPATIAL_TILE, hw)                 # spatial tokens per grid step
    assert hw % tsp == 0
    n_sp = hw // tsp

    x3 = x_nchw.reshape(b, c, hw)               # contiguous reshape only: no HBM round trip
    e2 = jnp.sum(params["emb"] * params["emb"], axis=-1)[None, :]    # (1, K), computed once

    full = lambda i, j: (0, 0)                  # constant index map -> weights stay resident
    in_specs = [
        pl.BlockSpec((1, d, tsp), lambda i, j: (i, 0, j)),           # x  (NCHW slab)
        pl.BlockSpec((d, d), full), pl.BlockSpec((1, d), full),      # project_in.0
        pl.BlockSpec((d, dc), full), pl.BlockSpec((1, dc), full),    # project_in.2
        pl.BlockSpec((1, dc), full), pl.BlockSpec((1, dc), full),    # norm_in
        pl.BlockSpec((k, dc), full), pl.BlockSpec((1, k), full),     # codebook, ||e||^2
        pl.BlockSpec((dc, d), full), pl.BlockSpec((1, d), full),     # project_out.0
        pl.BlockSpec((d, d), full), pl.BlockSpec((1, d), full),      # project_out.2
        pl.BlockSpec((1, d), full), pl.BlockSpec((1, d), full),      # norm_out
    ]
    out_specs = [
        pl.BlockSpec((1, tsp, d), lambda i, j: (i, j, 0)),           # quantized
        pl.BlockSpec((1, 1, tsp), lambda i, j: (i, j, 0)),           # indices (lane-dense)
    ]
    out_shape = [
        jax.ShapeDtypeStruct((b, hw, d), jnp.float32),
        jax.ShapeDtypeStruct((b, n_sp, tsp), jnp.int32),
    ]

    quant, idx = pl.pallas_call(
        vq_kernel,
        out_shape=out_shape,
        grid_spec=pltpu.PrefetchScalarGridSpec(
            num_scalar_prefetch=0,
            grid=(b, n_sp),
            in_specs=in_specs,
            out_specs=out_specs,
        ),
        compiler_params=pltpu.CompilerParams(
            dimension_semantics=("parallel", "parallel")),
    )(
        x3,
        params["w_in1"], params["b_in1"],
        params["w_in2"], params["b_in2"],
        params["g_in"], params["be_in"],
        params["emb"], e2,
        params["w_out1"], params["b_out1"],
        params["w_out2"], params["b_out2"],
        params["g_out"], params["be_out"],
    )

    # (b, j, t) order == token order b*HW + j*T + t, so these reshapes are pure views.
    encoding_indices = idx.reshape(-1, 1)                                   # (N, 1) int32
    encodings = jax.nn.one_hot(idx.reshape(b, hw), k, dtype=jnp.float32)    # (B, HW, K)
    return quant, encoding_indices, encodings


# ------------------------------- reference (pure JAX) --------------------------------
def reference_forward(x_nchw, p):
    b, c, h, w = x_nchw.shape
    f = x_nchw.reshape(b, c, h * w).transpose(0, 2, 1).reshape(-1, c)
    f = jnp.maximum(f @ p["w_in1"] + p["b_in1"][0], 0.0) @ p["w_in2"] + p["b_in2"][0]
    mu = f.mean(-1, keepdims=True); v = ((f - mu) ** 2).mean(-1, keepdims=True)
    f = (f - mu) / jnp.sqrt(v + LN_EPS) * p["g_in"][0] + p["be_in"][0]
    emb = p["emb"]
    # same argmin-equivalent reduced distance as the kernel (||f||^2 dropped)
    d = (emb ** 2).sum(-1)[None, :] - 2.0 * (f @ emb.T)
    idx = jnp.argmin(d, axis=-1)
    onehot = jax.nn.one_hot(idx, NUM_EMBEDDINGS, dtype=jnp.float32)
    q = onehot @ emb
    q = jnp.maximum(q @ p["w_out1"] + p["b_out1"][0], 0.0) @ p["w_out2"] + p["b_out2"][0]
    mu = q.mean(-1, keepdims=True); v = ((q - mu) ** 2).mean(-1, keepdims=True)
    q = (q - mu) / jnp.sqrt(v + LN_EPS) * p["g_out"][0] + p["be_out"][0]
    return (q.reshape(b, h * w, c),
            idx.reshape(-1, 1).astype(jnp.int32),
            onehot.reshape(b, h * w, -1))


# --------------------------------------- main -----------------------------------------
def init_params(key):
    """Deterministic synthetic parameters.  Linear weights stored as (in, out),
    i.e. the transpose of PyTorch's nn.Linear.weight, so the kernel does x @ W."""
    d, dc, k = EMBEDDING_DIM, CODEBOOK_DIM, NUM_EMBEDDINGS
    ks = jax.random.split(key, 8)
    s = lambda fan_in: 1.0 / jnp.sqrt(fan_in)
    return {
        "w_in1": jax.random.uniform(ks[0], (d, d), jnp.float32, -s(d), s(d)),
        "b_in1": jax.random.uniform(ks[1], (1, d), jnp.float32, -s(d), s(d)),
        "w_in2": jax.random.uniform(ks[2], (d, dc), jnp.float32, -s(d), s(d)),
        "b_in2": jax.random.uniform(ks[3], (1, dc), jnp.float32, -s(d), s(d)),
        "g_in": jnp.ones((1, dc), jnp.float32),
        "be_in": jnp.zeros((1, dc), jnp.float32),
        "emb": jax.random.normal(ks[4], (k, dc), jnp.float32),   # nn.Embedding init ~ N(0,1)
        "w_out1": jax.random.uniform(ks[5], (dc, d), jnp.float32, -s(dc), s(dc)),
        "b_out1": jax.random.uniform(ks[6], (1, d), jnp.float32, -s(dc), s(dc)),
        "w_out2": jax.random.uniform(ks[7], (d, d), jnp.float32, -s(d), s(d)),
        "b_out2": jax.random.uniform(jax.random.fold_in(key, 99), (1, d), jnp.float32,
                                     -s(d), s(d)),
        "g_out": jnp.ones((1, d), jnp.float32),
        "be_out": jnp.zeros((1, d), jnp.float32),
    }


if __name__ == "__main__":
    key = jax.random.PRNGKey(0)
    pkey, xkey = jax.random.split(key)
    params = init_params(pkey)
    x = jax.random.normal(xkey, (B, C, H, W), jnp.float32)   # NCHW, like the PyTorch module

    quant, idx, enc = base_vq_forward(x, params)
    jax.block_until_ready((quant, idx, enc))

    q_ref, i_ref, e_ref = reference_forward(x, params)
    assert quant.shape == (B, H * W, EMBEDDING_DIM)
    assert idx.shape == (B * H * W, 1)
    assert enc.shape == (B, H * W, NUM_EMBEDDINGS)
    assert jnp.allclose(quant, q_ref, atol=1e-4, rtol=1e-4)
    assert jnp.array_equal(idx, i_ref)
    assert jnp.array_equal(enc, e_ref)

    # TODO(synk): usage-buffer updates, random_restart, commitment/KLD losses, and the
    # optional `idxs` codebook-masking path are training-time host logic, not in this kernel.
    print("KERNEL_OK")
</pallas_src>

<mosaic_0001>
module attributes {stable_mosaic.version = 11 : i64} {
  func.func @vq_kernel(%arg0: i32, %arg1: i32, %arg2: memref<1x32x64xf32, #tpu.memory_space<vmem>>, %arg3: memref<32x32xf32, #tpu.memory_space<vmem>>, %arg4: memref<1x32xf32, #tpu.memory_space<vmem>>, %arg5: memref<32x8xf32, #tpu.memory_space<vmem>>, %arg6: memref<1x8xf32, #tpu.memory_space<vmem>>, %arg7: memref<1x8xf32, #tpu.memory_space<vmem>>, %arg8: memref<1x8xf32, #tpu.memory_space<vmem>>, %arg9: memref<16x8xf32, #tpu.memory_space<vmem>>, %arg10: memref<1x16xf32, #tpu.memory_space<vmem>>, %arg11: memref<8x32xf32, #tpu.memory_space<vmem>>, %arg12: memref<1x32xf32, #tpu.memory_space<vmem>>, %arg13: memref<32x32xf32, #tpu.memory_space<vmem>>, %arg14: memref<1x32xf32, #tpu.memory_space<vmem>>, %arg15: memref<1x32xf32, #tpu.memory_space<vmem>>, %arg16: memref<1x32xf32, #tpu.memory_space<vmem>>, %arg17: memref<1x64x32xf32, #tpu.memory_space<vmem>>, %arg18: memref<1x1x64xi32, #tpu.memory_space<vmem>>) attributes {dimension_semantics = [#tpu.dimension_semantics<parallel>, #tpu.dimension_semantics<parallel>], iteration_bounds = array<i64: 2, 1>, scalar_prefetch = 0 : i64, scratch_operands = 0 : i64, tpu.core_type = #tpu.core_type<tc>, window_params = [{transform_indices = @transform_0, window_bounds = array<i64: 1, 32, 64>}, {pipeline_mode = #tpu.pipeline_mode<synchronous>, transform_indices = @transform_1, window_bounds = array<i64: 32, 32>}, {pipeline_mode = #tpu.pipeline_mode<synchronous>, transform_indices = @transform_2, window_bounds = array<i64: 1, 32>}, {pipeline_mode = #tpu.pipeline_mode<synchronous>, transform_indices = @transform_3, window_bounds = array<i64: 32, 8>}, {pipeline_mode = #tpu.pipeline_mode<synchronous>, transform_indices = @transform_4, window_bounds = array<i64: 1, 8>}, {pipeline_mode = #tpu.pipeline_mode<synchronous>, transform_indices = @transform_5, window_bounds = array<i64: 1, 8>}, {pipeline_mode = #tpu.pipeline_mode<synchronous>, transform_indices = @transform_6, window_bounds = array<i64: 1, 8>}, {pipeline_mode = #tpu.pipeline_mode<synchronous>, transform_indices = @transform_7, window_bounds = array<i64: 16, 8>}, {pipeline_mode = #tpu.pipeline_mode<synchronous>, transform_indices = @transform_8, window_bounds = array<i64: 1, 16>}, {pipeline_mode = #tpu.pipeline_mode<synchronous>, transform_indices = @transform_9, window_bounds = array<i64: 8, 32>}, {pipeline_mode = #tpu.pipeline_mode<synchronous>, transform_indices = @transform_10, window_bounds = array<i64: 1, 32>}, {pipeline_mode = #tpu.pipeline_mode<synchronous>, transform_indices = @transform_11, window_bounds = array<i64: 32, 32>}, {pipeline_mode = #tpu.pipeline_mode<synchronous>, transform_indices = @transform_12, window_bounds = array<i64: 1, 32>}, {pipeline_mode = #tpu.pipeline_mode<synchronous>, transform_indices = @transform_13, window_bounds = array<i64: 1, 32>}, {pipeline_mode = #tpu.pipeline_mode<synchronous>, transform_indices = @transform_14, window_bounds = array<i64: 1, 32>}, {transform_indices = @transform_15, window_bounds = array<i64: 1, 64, 32>}, {transform_indices = @transform_16, window_bounds = array<i64: 1, 1, 64>}]} {
    %c0 = arith.constant 0 : index
    %c0_0 = arith.constant 0 : index
    %c0_1 = arith.constant 0 : index
    %0 = vector.load %arg2[%c0, %c0_0, %c0_1] : memref<1x32x64xf32, #tpu.memory_space<vmem>>, vector<1x32x64xf32>
    %1 = vector.shape_cast %0 : vector<1x32x64xf32> to vector<32x64xf32>
    %2 = tpu.transpose %1, [1, 0] : vector<32x64xf32> -> vector<64x32xf32>
    %c0_2 = arith.constant 0 : index
    %c0_3 = arith.constant 0 : index
    %3 = vector.load %arg3[%c0_2, %c0_3] : memref<32x32xf32, #tpu.memory_space<vmem>>, vector<32x32xf32>
    %cst = arith.constant dense<0.000000e+00> : vector<64x32xf32>
    %4 = tpu.matmul %2, %3, %cst {dimension_numbers = #tpu.dot_dimension_numbers<[1], [0], [0], [1], [0, 0, 1, 1], [], []>} : vector<64x32xf32>, vector<32x32xf32>, vector<64x32xf32> -> vector<64x32xf32>
    %c0_4 = arith.constant 0 : index
    %c0_5 = arith.constant 0 : index
    %5 = vector.load %arg4[%c0_4, %c0_5] : memref<1x32xf32, #tpu.memory_space<vmem>>, vector<1x32xf32>
    %6 = vector.broadcast %5 : vector<1x32xf32> to vector<64x32xf32>
    %7 = arith.addf %4, %6 : vector<64x32xf32>
    %cst_6 = arith.constant 0.000000e+00 : f32
    %8 = vector.broadcast %cst_6 : f32 to vector<64x32xf32>
    %9 = arith.maximumf %7, %8 : vector<64x32xf32>
    %c0_7 = arith.constant 0 : index
    %c0_8 = arith.constant 0 : index
    %10 = vector.load %arg5[%c0_7, %c0_8] : memref<32x8xf32, #tpu.memory_space<vmem>>, vector<32x8xf32>
    %cst_9 = arith.constant dense<0.000000e+00> : vector<64x8xf32>
    %11 = tpu.matmul %9, %10, %cst_9 {dimension_numbers = #tpu.dot_dimension_numbers<[1], [0], [0], [1], [0, 0, 1, 1], [], []>} : vector<64x32xf32>, vector<32x8xf32>, vector<64x8xf32> -> vector<64x8xf32>
    %c0_10 = arith.constant 0 : index
    %c0_11 = arith.constant 0 : index
    %12 = vector.load %arg6[%c0_10, %c0_11] : memref<1x8xf32, #tpu.memory_space<vmem>>, vector<1x8xf32>
    %13 = vector.broadcast %12 : vector<1x8xf32> to vector<64x8xf32>
    %14 = arith.addf %11, %13 : vector<64x8xf32>
    %cst_12 = arith.constant dense<0.000000e+00> : vector<64xf32>
    %15 = vector.multi_reduction <add>, %14, %cst_12 [1] : vector<64x8xf32> to vector<64xf32>
    %16 = vector.shape_cast %15 : vector<64xf32> to vector<64x1xf32>
    %cst_13 = arith.constant 8.000000e+00 : f32
    %17 = vector.broadcast %cst_13 : f32 to vector<64x1xf32>
    %18 = arith.divf %16, %17 : vector<64x1xf32>
    %19 = vector.broadcast %18 : vector<64x1xf32> to vector<64x8xf32>
    %20 = arith.subf %14, %19 : vector<64x8xf32>
    %21 = vector.broadcast %18 : vector<64x1xf32> to vector<64x8xf32>
    %22 = arith.subf %14, %21 : vector<64x8xf32>
    %23 = arith.mulf %20, %22 : vector<64x8xf32>
    %cst_14 = arith.constant dense<0.000000e+00> : vector<64xf32>
    %24 = vector.multi_reduction <add>, %23, %cst_14 [1] : vector<64x8xf32> to vector<64xf32>
    %25 = vector.shape_cast %24 : vector<64xf32> to vector<64x1xf32>
    %cst_15 = arith.constant 8.000000e+00 : f32
    %26 = vector.broadcast %cst_15 : f32 to vector<64x1xf32>
    %27 = arith.divf %25, %26 : vector<64x1xf32>
    %28 = vector.broadcast %18 : vector<64x1xf32> to vector<64x8xf32>
    %29 = arith.subf %14, %28 : vector<64x8xf32>
    %cst_16 = arith.constant 9.99999974E-6 : f32
    %30 = vector.broadcast %cst_16 : f32 to vector<64x1xf32>
    %31 = arith.addf %27, %30 : vector<64x1xf32>
    %32 = math.rsqrt %31 : vector<64x1xf32>
    %33 = vector.broadcast %32 : vector<64x1xf32> to vector<64x8xf32>
    %34 = arith.mulf %29, %33 : vector<64x8xf32>
    %c0_17 = arith.constant 0 : index
    %c0_18 = arith.constant 0 : index
    %35 = vector.load %arg7[%c0_17, %c0_18] : memref<1x8xf32, #tpu.memory_space<vmem>>, vector<1x8xf32>
    %36 = vector.broadcast %35 : vector<1x8xf32> to vector<64x8xf32>
    %37 = arith.mulf %34, %36 : vector<64x8xf32>
    %c0_19 = arith.constant 0 : index
    %c0_20 = arith.constant 0 : index
    %38 = vector.load %arg8[%c0_19, %c0_20] : memref<1x8xf32, #tpu.memory_space<vmem>>, vector<1x8xf32>
    %39 = vector.broadcast %38 : vector<1x8xf32> to vector<64x8xf32>
    %40 = arith.addf %37, %39 : vector<64x8xf32>
    %c0_21 = arith.constant 0 : index
    %c0_22 = arith.constant 0 : index
    %41 = vector.load %arg9[%c0_21, %c0_22] : memref<16x8xf32, #tpu.memory_space<vmem>>, vector<16x8xf32>
    %cst_23 = arith.constant dense<0.000000e+00> : vector<64x16xf32>
    %42 = tpu.matmul %40, %41, %cst_23 {dimension_numbers = #tpu.dot_dimension_numbers<[1], [1], [0], [0], [0, 0, 1, 0], [], []>} : vector<64x8xf32>, vector<16x8xf32>, vector<64x16xf32> -> vector<64x16xf32>
    %c0_24 = arith.constant 0 : index
    %c0_25 = arith.constant 0 : index
    %43 = vector.load %arg10[%c0_24, %c0_25] : memref<1x16xf32, #tpu.memory_space<vmem>>, vector<1x16xf32>
    %cst_26 = arith.constant 2.000000e+00 : f32
    %44 = vector.broadcast %cst_26 : f32 to vector<64x16xf32>
    %45 = arith.mulf %44, %42 : vector<64x16xf32>
    %46 = vector.broadcast %43 : vector<1x16xf32> to vector<64x16xf32>
    %47 = arith.subf %46, %45 : vector<64x16xf32>
    %48 = tpu.iota {dimensions = array<i32: 1>} : vector<64x16xi32>
    %cst_27 = arith.constant dense<0x7F800000> : vector<64xf32>
    %49 = vector.multi_reduction <minimumf>, %47, %cst_27 [1] : vector<64x16xf32> to vector<64xf32>
    %50 = vector.shape_cast %49 : vector<64xf32> to vector<64x1xf32>
    %51 = vector.broadcast %50 : vector<64x1xf32> to vector<64x16xf32>
    %52 = arith.cmpf ole, %47, %51 : vector<64x16xf32>
    %c1073741824_i32 = arith.constant 1073741824 : i32
    %53 = vector.broadcast %c1073741824_i32 : i32 to vector<64x16xi32>
    %54 = arith.select %52, %48, %53 : vector<64x16xi1>, vector<64x16xi32>
    %cst_28 = arith.constant dense<2147483647> : vector<64xi32>
    %55 = vector.multi_reduction <minsi>, %54, %cst_28 [1] : vector<64x16xi32> to vector<64xi32>
    %56 = vector.shape_cast %55 : vector<64xi32> to vector<64x1xi32>
    %57 = vector.broadcast %56 : vector<64x1xi32> to vector<64x16xi32>
    %58 = arith.cmpi eq, %48, %57 : vector<64x16xi32>
    %59 = arith.extui %58 : vector<64x16xi1> to vector<64x16xi32>
    %60 = arith.sitofp %59 : vector<64x16xi32> to vector<64x16xf32>
    %cst_29 = arith.constant dense<0.000000e+00> : vector<64x8xf32>
    %61 = tpu.matmul %60, %41, %cst_29 {dimension_numbers = #tpu.dot_dimension_numbers<[1], [0], [0], [1], [0, 0, 1, 1], [], []>} : vector<64x16xf32>, vector<16x8xf32>, vector<64x8xf32> -> vector<64x8xf32>
    %c0_30 = arith.constant 0 : index
    %c0_31 = arith.constant 0 : index
    %62 = vector.load %arg11[%c0_30, %c0_31] : memref<8x32xf32, #tpu.memory_space<vmem>>, vector<8x32xf32>
    %cst_32 = arith.constant dense<0.000000e+00> : vector<64x32xf32>
    %63 = tpu.matmul %61, %62, %cst_32 {dimension_numbers = #tpu.dot_dimension_numbers<[1], [0], [0], [1], [0, 0, 1, 1], [], []>} : vector<64x8xf32>, vector<8x32xf32>, vector<64x32xf32> -> vector<64x32xf32>
    %c0_33 = arith.constant 0 : index
    %c0_34 = arith.constant 0 : index
    %64 = vector.load %arg12[%c0_33, %c0_34] : memref<1x32xf32, #tpu.memory_space<vmem>>, vector<1x32xf32>
    %65 = vector.broadcast %64 : vector<1x32xf32> to vector<64x32xf32>
    %66 = arith.addf %63, %65 : vector<64x32xf32>
    %cst_35 = arith.constant 0.000000e+00 : f32
    %67 = vector.broadcast %cst_35 : f32 to vector<64x32xf32>
    %68 = arith.maximumf %66, %67 : vector<64x32xf32>
    %c0_36 = arith.constant 0 : index
    %c0_37 = arith.constant 0 : index
    %69 = vector.load %arg13[%c0_36, %c0_37] : memref<32x32xf32, #tpu.memory_space<vmem>>, vector<32x32xf32>
    %cst_38 = arith.constant dense<0.000000e+00> : vector<64x32xf32>
    %70 = tpu.matmul %68, %69, %cst_38 {dimension_numbers = #tpu.dot_dimension_numbers<[1], [0], [0], [1], [0, 0, 1, 1], [], []>} : vector<64x32xf32>, vector<32x32xf32>, vector<64x32xf32> -> vector<64x32xf32>
    %c0_39 = arith.constant 0 : index
    %c0_40 = arith.constant 0 : index
    %71 = vector.load %arg14[%c0_39, %c0_40] : memref<1x32xf32, #tpu.memory_space<vmem>>, vector<1x32xf32>
    %72 = vector.broadcast %71 : vector<1x32xf32> to vector<64x32xf32>
    %73 = arith.addf %70, %72 : vector<64x32xf32>
    %cst_41 = arith.constant dense<0.000000e+00> : vector<64xf32>
    %74 = vector.multi_reduction <add>, %73, %cst_41 [1] : vector<64x32xf32> to vector<64xf32>
    %75 = vector.shape_cast %74 : vector<64xf32> to vector<64x1xf32>
    %cst_42 = arith.constant 3.200000e+01 : f32
    %76 = vector.broadcast %cst_42 : f32 to vector<64x1xf32>
    %77 = arith.divf %75, %76 : vector<64x1xf32>
    %78 = vector.broadcast %77 : vector<64x1xf32> to vector<64x32xf32>
    %79 = arith.subf %73, %78 : vector<64x32xf32>
    %80 = vector.broadcast %77 : vector<64x1xf32> to vector<64x32xf32>
    %81 = arith.subf %73, %80 : vector<64x32xf32>
    %82 = arith.mulf %79, %81 : vector<64x32xf32>
    %cst_43 = arith.constant dense<0.000000e+00> : vector<64xf32>
    %83 = vector.multi_reduction <add>, %82, %cst_43 [1] : vector<64x32xf32> to vector<64xf32>
    %84 = vector.shape_cast %83 : vector<64xf32> to vector<64x1xf32>
    %cst_44 = arith.constant 3.200000e+01 : f32
    %85 = vector.broadcast %cst_44 : f32 to vector<64x1xf32>
    %86 = arith.divf %84, %85 : vector<64x1xf32>
    %87 = vector.broadcast %77 : vector<64x1xf32> to vector<64x32xf32>
    %88 = arith.subf %73, %87 : vector<64x32xf32>
    %cst_45 = arith.constant 9.99999974E-6 : f32
    %89 = vector.broadcast %cst_45 : f32 to vector<64x1xf32>
    %90 = arith.addf %86, %89 : vector<64x1xf32>
    %91 = math.rsqrt %90 : vector<64x1xf32>
    %92 = vector.broadcast %91 : vector<64x1xf32> to vector<64x32xf32>
    %93 = arith.mulf %88, %92 : vector<64x32xf32>
    %c0_46 = arith.constant 0 : index
    %c0_47 = arith.constant 0 : index
    %94 = vector.load %arg15[%c0_46, %c0_47] : memref<1x32xf32, #tpu.memory_space<vmem>>, vector<1x32xf32>
    %95 = vector.broadcast %94 : vector<1x32xf32> to vector<64x32xf32>
    %96 = arith.mulf %93, %95 : vector<64x32xf32>
    %c0_48 = arith.constant 0 : index
    %c0_49 = arith.constant 0 : index
    %97 = vector.load %arg16[%c0_48, %c0_49] : memref<1x32xf32, #tpu.memory_space<vmem>>, vector<1x32xf32>
    %98 = vector.broadcast %97 : vector<1x32xf32> to vector<64x32xf32>
    %99 = arith.addf %96, %98 : vector<64x32xf32>
    %c0_50 = arith.constant 0 : index
    %c0_51 = arith.constant 0 : index
    %c0_52 = arith.constant 0 : index
    %100 = vector.load %arg17[%c0_50, %c0_51, %c0_52] : memref<1x64x32xf32, #tpu.memory_space<vmem>>, vector<1x64x32xf32>
    %101 = vector.shape_cast %100 : vector<1x64x32xf32> to vector<64x32xf32>
    %102 = vector.shape_cast %99 : vector<64x32xf32> to vector<1x64x32xf32>
    tpu.vector_store %arg17[%c0_50, %c0_51, %c0_52], %102 {strides = array<i32>} : memref<1x64x32xf32, #tpu.memory_space<vmem>>, vector<1x64x32xf32>,
    %103 = tpu.iota {dimensions = array<i32: 1>} : vector<8x16xi32>
    %104 = arith.sitofp %103 : vector<8x16xi32> to vector<8x16xf32>
    %cst_53 = arith.constant dense<0.000000e+00> : vector<8x64xf32>
    %105 = tpu.matmul %104, %60, %cst_53 {dimension_numbers = #tpu.dot_dimension_numbers<[1], [1], [0], [0], [0, 0, 1, 0], [], []>} : vector<8x16xf32>, vector<64x16xf32>, vector<8x64xf32> -> vector<8x64xf32>
    %106 = vector.extract_strided_slice %105 {offsets = [0, 0], sizes = [1, 64], strides = [1, 1]} : vector<8x64xf32> to vector<1x64xf32>
    %107 = arith.fptosi %106 : vector<1x64xf32> to vector<1x64xi32>
    %c0_54 = arith.constant 0 : index
    %c0_55 = arith.constant 0 : index
    %c0_56 = arith.constant 0 : index
    %108 = vector.load %arg18[%c0_54, %c0_55, %c0_56] : memref<1x1x64xi32, #tpu.memory_space<vmem>>, vector<1x1x64xi32>
    %109 = vector.shape_cast %108 : vector<1x1x64xi32> to vector<1x64xi32>
    %110 = vector.shape_cast %107 : vector<1x64xi32> to vector<1x1x64xi32>
    tpu.vector_store %arg18[%c0_54, %c0_55, %c0_56], %110 {strides = array<i32>} : memref<1x1x64xi32, #tpu.memory_space<vmem>>, vector<1x1x64xi32>,
    return
  }
  func.func @transform_0(%arg0: i32, %arg1: i32) -> (i32, i32, i32) {
    %c0_i32 = arith.constant 0 : i32
    %c0_i32_0 = arith.constant 0 : i32
    return %arg0, %c0_i32, %arg1 : i32, i32, i32
  }
  func.func @transform_1(%arg0: i32, %arg1: i32) -> (i32, i32) {
    %c0_i32 = arith.constant 0 : i32
    %c0_i32_0 = arith.constant 0 : i32
    %c0_i32_1 = arith.constant 0 : i32
    return %c0_i32, %c0_i32_0 : i32, i32
  }
  func.func @transform_2(%arg0: i32, %arg1: i32) -> (i32, i32) {
    %c0_i32 = arith.constant 0 : i32
    %c0_i32_0 = arith.constant 0 : i32
    %c0_i32_1 = arith.constant 0 : i32
    return %c0_i32, %c0_i32_0 : i32, i32
  }
  func.func @transform_3(%arg0: i32, %arg1: i32) -> (i32, i32) {
    %c0_i32 = arith.constant 0 : i32
    %c0_i32_0 = arith.constant 0 : i32
    %c0_i32_1 = arith.constant 0 : i32
    return %c0_i32, %c0_i32_0 : i32, i32
  }
  func.func @transform_4(%arg0: i32, %arg1: i32) -> (i32, i32) {
    %c0_i32 = arith.constant 0 : i32
    %c0_i32_0 = arith.constant 0 : i32
    %c0_i32_1 = arith.constant 0 : i32
    return %c0_i32, %c0_i32_0 : i32, i32
  }
  func.func @transform_5(%arg0: i32, %arg1: i32) -> (i32, i32) {
    %c0_i32 = arith.constant 0 : i32
    %c0_i32_0 = arith.constant 0 : i32
    %c0_i32_1 = arith.constant 0 : i32
    return %c0_i32, %c0_i32_0 : i32, i32
  }
  func.func @transform_6(%arg0: i32, %arg1: i32) -> (i32, i32) {
    %c0_i32 = arith.constant 0 : i32
    %c0_i32_0 = arith.constant 0 : i32
    %c0_i32_1 = arith.constant 0 : i32
    return %c0_i32, %c0_i32_0 : i32, i32
  }
  func.func @transform_7(%arg0: i32, %arg1: i32) -> (i32, i32) {
    %c0_i32 = arith.constant 0 : i32
    %c0_i32_0 = arith.constant 0 : i32
    %c0_i32_1 = arith.constant 0 : i32
    return %c0_i32, %c0_i32_0 : i32, i32
  }
  func.func @transform_8(%arg0: i32, %arg1: i32) -> (i32, i32) {
    %c0_i32 = arith.constant 0 : i32
    %c0_i32_0 = arith.constant 0 : i32
    %c0_i32_1 = arith.constant 0 : i32
    return %c0_i32, %c0_i32_0 : i32, i32
  }
  func.func @transform_9(%arg0: i32, %arg1: i32) -> (i32, i32) {
    %c0_i32 = arith.constant 0 : i32
    %c0_i32_0 = arith.constant 0 : i32
    %c0_i32_1 = arith.constant 0 : i32
    return %c0_i32, %c0_i32_0 : i32, i32
  }
  func.func @transform_10(%arg0: i32, %arg1: i32) -> (i32, i32) {
    %c0_i32 = arith.constant 0 : i32
    %c0_i32_0 = arith.constant 0 : i32
    %c0_i32_1 = arith.constant 0 : i32
    return %c0_i32, %c0_i32_0 : i32, i32
  }
  func.func @transform_11(%arg0: i32, %arg1: i32) -> (i32, i32) {
    %c0_i32 = arith.constant 0 : i32
    %c0_i32_0 = arith.constant 0 : i32
    %c0_i32_1 = arith.constant 0 : i32
    return %c0_i32, %c0_i32_0 : i32, i32
  }
  func.func @transform_12(%arg0: i32, %arg1: i32) -> (i32, i32) {
    %c0_i32 = arith.constant 0 : i32
    %c0_i32_0 = arith.constant 0 : i32
    %c0_i32_1 = arith.constant 0 : i32
    return %c0_i32, %c0_i32_0 : i32, i32
  }
  func.func @transform_13(%arg0: i32, %arg1: i32) -> (i32, i32) {
    %c0_i32 = arith.constant 0 : i32
    %c0_i32_0 = arith.constant 0 : i32
    %c0_i32_1 = arith.constant 0 : i32
    return %c0_i32, %c0_i32_0 : i32, i32
  }
  func.func @transform_14(%arg0: i32, %arg1: i32) -> (i32, i32) {
    %c0_i32 = arith.constant 0 : i32
    %c0_i32_0 = arith.constant 0 : i32
    %c0_i32_1 = arith.constant 0 : i32
    return %c0_i32, %c0_i32_0 : i32, i32
  }
  func.func @transform_15(%arg0: i32, %arg1: i32) -> (i32, i32, i32) {
    %c0_i32 = arith.constant 0 : i32
    %c0_i32_0 = arith.constant 0 : i32
    return %arg0, %arg1, %c0_i32 : i32, i32, i32
  }
  func.func @transform_16(%arg0: i32, %arg1: i32) -> (i32, i32, i32) {
    %c0_i32 = arith.constant 0 : i32
    %c0_i32_0 = arith.constant 0 : i32
    return %arg0, %arg1, %c0_i32 : i32, i32, i32
  }
}

</mosaic_0001>

<llo_original>
// kernel: base_vq_forward.1
$region0: #{base_vq_forward.1}
  #allocation0 [shape = 'u32[]', space=smem, size = 0x4, offset = 0x4, fixed_abs, tag = 'smem constant byte address 0x4 - core index']
  #allocation1 [shape = 'u32[144,128]{1,0:T(1,128)}', space=vmem, size = 0x12000, scoped, tag = 'internal scratch']
  %s0 = inlined_call_operand.vmem [shape: f32[2,32,64], index: 0, kind: input, shape index: {}]
  %s1 = inlined_call_operand.vmem [shape: f32[32,32], index: 1, kind: input, shape index: {}]
  %s2 = inlined_call_operand.vmem [shape: f32[1,32], index: 2, kind: input, shape index: {}]
  %s3 = inlined_call_operand.vmem [shape: f32[32,8], index: 3, kind: input, shape index: {}]
  %s4 = inlined_call_operand.vmem [shape: f32[1,8], index: 4, kind: input, shape index: {}]
  %s5 = inlined_call_operand.vmem [shape: f32[1,8], index: 5, kind: input, shape index: {}]
  %s6 = inlined_call_operand.vmem [shape: f32[1,8], index: 6, kind: input, shape index: {}]
  %s7 = inlined_call_operand.vmem [shape: f32[16,8], index: 7, kind: input, shape index: {}]
  %s8 = inlined_call_operand.vmem [shape: f32[1,16], index: 8, kind: input, shape index: {}]
  %s9 = inlined_call_operand.vmem [shape: f32[8,32], index: 9, kind: input, shape index: {}]
  %s10 = inlined_call_operand.vmem [shape: f32[1,32], index: 10, kind: input, shape index: {}]
  %s11 = inlined_call_operand.vmem [shape: f32[32,32], index: 11, kind: input, shape index: {}]
  %s12 = inlined_call_operand.vmem [shape: f32[1,32], index: 12, kind: input, shape index: {}]
  %s13 = inlined_call_operand.vmem [shape: f32[1,32], index: 13, kind: input, shape index: {}]
  %s14 = inlined_call_operand.vmem [shape: f32[1,32], index: 14, kind: input, shape index: {}]
  %s15 = inlined_call_operand.vmem [shape: f32[2,64,32], index: 15, kind: output, shape index: {0}]
  %s16 = inlined_call_operand.vmem [shape: s32[2,1,64], index: 16, kind: output, shape index: {1}]
  %17 = xla_tuple %s15, %s16
  %s18 = sld [smem:[#allocation0]]
  $region101: #{base_vq_forward.1} parent=0
    _
  %s20 = ssub.s32 1, %s18
  %s21 = scalar_select 0, %s20, %s18
  loop: start=0, step=1, limit=4
  $region2: #{base_vq_forward.1} parent=0 // loop_pre_header
    _
  $region3: #{base_vq_forward.1} parent=0 // loop_header
    %s23 = sphi 0, %s27
    %p24 = scmp.ge.s32.totalorder %s23, 4
    %s30 = sphi 0, %s42
    %s31 = sphi 0, %s38
    %s32 = sphi 0, %s30
    %s33 = sphi 0, %s31
    %s34 = sphi 0, %s32
    %s35 = sphi 0, %s33
    %s47 = sphi 0, %s49
    %s50 = sphi 0, %s47
    %s51 = sphi 0, %s50
    %s67 = sphi 0, %s51
    %s71 = sphi 0, %s71
    %s73 = sphi 0, %s71
    %s74 = sphi 0, %s73
    %s88 = sphi 0, %s74
    %s92 = sphi 0, %s92
    %s94 = sphi 0, %s92
    %s95 = sphi 0, %s94
    %s109 = sphi 0, %s95
    %s113 = sphi 0, %s113
    %s115 = sphi 0, %s113
    %s116 = sphi 0, %s115
    %s130 = sphi 0, %s116
    %s134 = sphi 0, %s134
    %s136 = sphi 0, %s134
    %s137 = sphi 0, %s136
    %s151 = sphi 0, %s137
    %s155 = sphi 0, %s155
    %s157 = sphi 0, %s155
    %s158 = sphi 0, %s157
    %s172 = sphi 0, %s158
    %s176 = sphi 0, %s176
    %s178 = sphi 0, %s176
    %s179 = sphi 0, %s178
    %s193 = sphi 0, %s179
    %s197 = sphi 0, %s197
    %s199 = sphi 0, %s197
    %s200 = sphi 0, %s199
    %s214 = sphi 0, %s200
    %s218 = sphi 0, %s218
    %s220 = sphi 0, %s218
    %s221 = sphi 0, %s220
    %s235 = sphi 0, %s221
    %s239 = sphi 0, %s239
    %s241 = sphi 0, %s239
    %s242 = sphi 0, %s241
    %s256 = sphi 0, %s242
    %s260 = sphi 0, %s260
    %s262 = sphi 0, %s260
    %s263 = sphi 0, %s262
    %s277 = sphi 0, %s263
    %s281 = sphi 0, %s281
    %s283 = sphi 0, %s281
    %s284 = sphi 0, %s283
    %s298 = sphi 0, %s284
    %s302 = sphi 0, %s302
    %s304 = sphi 0, %s302
    %s305 = sphi 0, %s304
    %s319 = sphi 0, %s305
    %s323 = sphi 0, %s323
    %s325 = sphi 0, %s323
    %s326 = sphi 0, %s325
    %s340 = sphi 0, %s326
    %s344 = sphi 0, %s344
    %s346 = sphi 0, %s344
    %s347 = sphi 0, %s346
    %s361 = sphi 0, %s347
    %s369 = sphi 0, %s371
    %s372 = sphi 0, %s369
    %s373 = sphi 0, %s372
    %s389 = sphi 0, %s373
    %s397 = sphi 0, %s399
    %s400 = sphi 0, %s397
    %s401 = sphi 0, %s400
    %s417 = sphi 0, %s401
  $region4: #{base_vq_forward.1} parent=0 // loop_header_branch
    %26 = sbr.rel (%p24) target = $region8
  $region5: #{base_vq_forward.1} parent=0 // loop_body
    %s28 = ssub.s32 %s23, 1
    %s29 = ssub.s32 %s23, 2
    %s36 = sadd.s32 1, %s31
    %p37 = scmp.ge.s32.totalorder %s36, 1
    %s38 = scalar_select %p37, 0, %s36
    %s39 = sadd.s32 1, %s30
    %s40 = scalar_select %p37, %s39, %s30
    %p41 = scmp.ge.s32.totalorder %s40, 2
    %s42 = scalar_select %p41, 0, %s40
    %s43 = ssub.s32 %s30, %s42
    %s44 = ssub.s32 %s31, %s38
    %s45 = sor.u32 %s43, %s44
    %p46 = scmp.eq.s32.totalorder %s45, 0
    %s48 = sadd.s32 %s47, 1
    %s49 = scalar_select %p46, %s47, %s48
    %p52 = pneg %p46
    %p53 = scmp.eq.s32.totalorder %s23, 1
    %p54 = por %p52, %p53
    %p55 = scmp.ne.s32.totalorder %s47, %s50
    %p56 = scmp.eq.s32.totalorder %s23, 0
    %p57 = por %p55, %p56
    %p58 = scmp.ne.s32.totalorder %s47, %s50
    %p59 = scmp.eq.s32.totalorder %s28, 1
    %p60 = por %p58, %p59
    %p61 = scmp.ne.s32.totalorder %s50, %s51
    %p62 = scmp.eq.s32.totalorder %s28, 0
    %p63 = por %p61, %p62
    %p64 = scmp.ne.s32.totalorder %s50, %s51
    %p65 = scmp.eq.s32.totalorder %s29, 1
    %p66 = por %p64, %p65
    %p68 = scmp.ne.s32.totalorder %s51, %s67
    %p69 = scmp.eq.s32.totalorder %s29, 0
    %p70 = por %p68, %p69
    %s72 = sadd.s32 %s71, 1
    %p75 = scmp.eq.s32.totalorder %s23, 1
    %p76 = scmp.ne.s32.totalorder %s71, %s73
    %p77 = scmp.eq.s32.totalorder %s23, 0
    %p78 = por %p76, %p77
    %p79 = scmp.ne.s32.totalorder %s71, %s73
    %p80 = scmp.eq.s32.totalorder %s28, 1
    %p81 = por %p79, %p80
    %p82 = scmp.ne.s32.totalorder %s73, %s74
    %p83 = scmp.eq.s32.totalorder %s28, 0
    %p84 = por %p82, %p83
    %p85 = scmp.ne.s32.totalorder %s73, %s74
    %p86 = scmp.eq.s32.totalorder %s29, 1
    %p87 = por %p85, %p86
    %p89 = scmp.ne.s32.totalorder %s74, %s88
    %p90 = scmp.eq.s32.totalorder %s29, 0
    %p91 = por %p89, %p90
    %s93 = sadd.s32 %s92, 1
    %p96 = scmp.eq.s32.totalorder %s23, 1
    %p97 = scmp.ne.s32.totalorder %s92, %s94
    %p98 = scmp.eq.s32.totalorder %s23, 0
    %p99 = por %p97, %p98
    %p100 = scmp.ne.s32.totalorder %s92, %s94
    %p101 = scmp.eq.s32.totalorder %s28, 1
    %p102 = por %p100, %p101
    %p103 = scmp.ne.s32.totalorder %s94, %s95
    %p104 = scmp.eq.s32.totalorder %s28, 0
    %p105 = por %p103, %p104
    %p106 = scmp.ne.s32.totalorder %s94, %s95
    %p107 = scmp.eq.s32.totalorder %s29, 1
    %p108 = por %p106, %p107
    %p110 = scmp.ne.s32.totalorder %s95, %s109
    %p111 = scmp.eq.s32.totalorder %s29, 0
    %p112 = por %p110, %p111
    %s114 = sadd.s32 %s113, 1
    %p117 = scmp.eq.s32.totalorder %s23, 1
    %p118 = scmp.ne.s32.totalorder %s113, %s115
    %p119 = scmp.eq.s32.totalorder %s23, 0
    %p120 = por %p118, %p119
    %p121 = scmp.ne.s32.totalorder %s113, %s115
    %p122 = scmp.eq.s32.totalorder %s28, 1
    %p123 = por %p121, %p122
    %p124 = scmp.ne.s32.totalorder %s115, %s116
    %p125 = scmp.eq.s32.totalorder %s28, 0
    %p126 = por %p124, %p125
    %p127 = scmp.ne.s32.totalorder %s115, %s116
    %p128 = scmp.eq.s32.totalorder %s29, 1
    %p129 = por %p127, %p128
    %p131 = scmp.ne.s32.totalorder %s116, %s130
    %p132 = scmp.eq.s32.totalorder %s29, 0
    %p133 = por %p131, %p132
    %s135 = sadd.s32 %s134, 1
    %p138 = scmp.eq.s32.totalorder %s23, 1
    %p139 = scmp.ne.s32.totalorder %s134, %s136
    %p140 = scmp.eq.s32.totalorder %s23, 0
    %p141 = por %p139, %p140
    %p142 = scmp.ne.s32.totalorder %s134, %s136
    %p143 = scmp.eq.s32.totalorder %s28, 1
    %p144 = por %p142, %p143
    %p145 = scmp.ne.s32.totalorder %s136, %s137
    %p146 = scmp.eq.s32.totalorder %s28, 0
    %p147 = por %p145, %p146
    %p148 = scmp.ne.s32.totalorder %s136, %s137
    %p149 = scmp.eq.s32.totalorder %s29, 1
    %p150 = por %p148, %p149
    %p152 = scmp.ne.s32.totalorder %s137, %s151
    %p153 = scmp.eq.s32.totalorder %s29, 0
    %p154 = por %p152, %p153
    %s156 = sadd.s32 %s155, 1
    %p159 = scmp.eq.s32.totalorder %s23, 1
    %p160 = scmp.ne.s32.totalorder %s155, %s157
    %p161 = scmp.eq.s32.totalorder %s23, 0
    %p162 = por %p160, %p161
    %p163 = scmp.ne.s32.totalorder %s155, %s157
    %p164 = scmp.eq.s32.totalorder %s28, 1
    %p165 = por %p163, %p164
    %p166 = scmp.ne.s32.totalorder %s157, %s158
    %p167 = scmp.eq.s32.totalorder %s28, 0
    %p168 = por %p166, %p167
    %p169 = scmp.ne.s32.totalorder %s157, %s158
    %p170 = scmp.eq.s32.totalorder %s29, 1
    %p171 = por %p169, %p170
    %p173 = scmp.ne.s32.totalorder %s158, %s172
    %p174 = scmp.eq.s32.totalorder %s29, 0
    %p175 = por %p173, %p174
    %s177 = sadd.s32 %s176, 1
    %p180 = scmp.eq.s32.totalorder %s23, 1
    %p181 = scmp.ne.s32.totalorder %s176, %s178
    %p182 = scmp.eq.s32.totalorder %s23, 0
    %p183 = por %p181, %p182
    %p184 = scmp.ne.s32.totalorder %s176, %s178
    %p185 = scmp.eq.s32.totalorder %s28, 1
    %p186 = por %p184, %p185
    %p187 = scmp.ne.s32.totalorder %s178, %s179
    %p188 = scmp.eq.s32.totalorder %s28, 0
    %p189 = por %p187, %p188
    %p190 = scmp.ne.s32.totalorder %s178, %s179
    %p191 = scmp.eq.s32.totalorder %s29, 1
    %p192 = por %p190, %p191
    %p194 = scmp.ne.s32.totalorder %s179, %s193
    %p195 = scmp.eq.s32.totalorder %s29, 0
    %p196 = por %p194, %p195
    %s198 = sadd.s32 %s197, 1
    %p201 = scmp.eq.s32.totalorder %s23, 1
    %p202 = scmp.ne.s32.totalorder %s197, %s199
    %p203 = scmp.eq.s32.totalorder %s23, 0
    %p204 = por %p202, %p203
    %p205 = scmp.ne.s32.totalorder %s197, %s199
    %p206 = scmp.eq.s32.totalorder %s28, 1
    %p207 = por %p205, %p206
    %p208 = scmp.ne.s32.totalorder %s199, %s200
    %p209 = scmp.eq.s32.totalorder %s28, 0
    %p210 = por %p208, %p209
    %p211 = scmp.ne.s32.totalorder %s199, %s200
    %p212 = scmp.eq.s32.totalorder %s29, 1
    %p213 = por %p211, %p212
    %p215 = scmp.ne.s32.totalorder %s200, %s214
    %p216 = scmp.eq.s32.totalorder %s29, 0
    %p217 = por %p215, %p216
    %s219 = sadd.s32 %s218, 1
    %p222 = scmp.eq.s32.totalorder %s23, 1
    %p223 = scmp.ne.s32.totalorder %s218, %s220
    %p224 = scmp.eq.s32.totalorder %s23, 0
    %p225 = por %p223, %p224
    %p226 = scmp.ne.s32.totalorder %s218, %s220
    %p227 = scmp.eq.s32.totalorder %s28, 1
    %p228 = por %p226, %p227
    %p229 = scmp.ne.s32.totalorder %s220, %s221
    %p230 = scmp.eq.s32.totalorder %s28, 0
    %p231 = por %p229, %p230
    %p232 = scmp.ne.s32.totalorder %s220, %s221
    %p233 = scmp.eq.s32.totalorder %s29, 1
    %p234 = por %p232, %p233
    %p236 = scmp.ne.s32.totalorder %s221, %s235
    %p237 = scmp.eq.s32.totalorder %s29, 0
    %p238 = por %p236, %p237
    %s240 = sadd.s32 %s239, 1
    %p243 = scmp.eq.s32.totalorder %s23, 1
    %p244 = scmp.ne.s32.totalorder %s239, %s241
    %p245 = scmp.eq.s32.totalorder %s23, 0
    %p246 = por %p244, %p245
    %p247 = scmp.ne.s32.totalorder %s239, %s241
    %p248 = scmp.eq.s32.totalorder %s28, 1
    %p249 = por %p247, %p248
    %p250 = scmp.ne.s32.totalorder %s241, %s242
    %p251 = scmp.eq.s32.totalorder %s28, 0
    %p252 = por %p250, %p251
    %p253 = scmp.ne.s32.totalorder %s241, %s242
    %p254 = scmp.eq.s32.totalorder %s29, 1
    %p255 = por %p253, %p254
    %p257 = scmp.ne.s32.totalorder %s242, %s256
    %p258 = scmp.eq.s32.totalorder %s29, 0
    %p259 = por %p257, %p258
    %s261 = sadd.s32 %s260, 1
    %p264 = scmp.eq.s32.totalorder %s23, 1
    %p265 = scmp.ne.s32.totalorder %s260, %s262
    %p266 = scmp.eq.s32.totalorder %s23, 0
    %p267 = por %p265, %p266
    %p268 = scmp.ne.s32.totalorder %s260, %s262
    %p269 = scmp.eq.s32.totalorder %s28, 1
    %p270 = por %p268, %p269
    %p271 = scmp.ne.s32.totalorder %s262, %s263
    %p272 = scmp.eq.s32.totalorder %s28, 0
    %p273 = por %p271, %p272
    %p274 = scmp.ne.s32.totalorder %s262, %s263
    %p275 = scmp.eq.s32.totalorder %s29, 1
    %p276 = por %p274, %p275
    %p278 = scmp.ne.s32.totalorder %s263, %s277
    %p279 = scmp.eq.s32.totalorder %s29, 0
    %p280 = por %p278, %p279
    %s282 = sadd.s32 %s281, 1
    %p285 = scmp.eq.s32.totalorder %s23, 1
    %p286 = scmp.ne.s32.totalorder %s281, %s283
    %p287 = scmp.eq.s32.totalorder %s23, 0
    %p288 = por %p286, %p287
    %p289 = scmp.ne.s32.totalorder %s281, %s283
    %p290 = scmp.eq.s32.totalorder %s28, 1
    %p291 = por %p289, %p290
    %p292 = scmp.ne.s32.totalorder %s283, %s284
    %p293 = scmp.eq.s32.totalorder %s28, 0
    %p294 = por %p292, %p293
    %p295 = scmp.ne.s32.totalorder %s283, %s284
    %p296 = scmp.eq.s32.totalorder %s29, 1
    %p297 = por %p295, %p296
    %p299 = scmp.ne.s32.totalorder %s284, %s298
    %p300 = scmp.eq.s32.totalorder %s29, 0
    %p301 = por %p299, %p300
    %s303 = sadd.s32 %s302, 1
    %p306 = scmp.eq.s32.totalorder %s23, 1
    %p307 = scmp.ne.s32.totalorder %s302, %s304
    %p308 = scmp.eq.s32.totalorder %s23, 0
    %p309 = por %p307, %p308
    %p310 = scmp.ne.s32.totalorder %s302, %s304
    %p311 = scmp.eq.s32.totalorder %s28, 1
    %p312 = por %p310, %p311
    %p313 = scmp.ne.s32.totalorder %s304, %s305
    %p314 = scmp.eq.s32.totalorder %s28, 0
    %p315 = por %p313, %p314
    %p316 = scmp.ne.s32.totalorder %s304, %s305
    %p317 = scmp.eq.s32.totalorder %s29, 1
    %p318 = por %p316, %p317
    %p320 = scmp.ne.s32.totalorder %s305, %s319
    %p321 = scmp.eq.s32.totalorder %s29, 0
    %p322 = por %p320, %p321
    %s324 = sadd.s32 %s323, 1
    %p327 = scmp.eq.s32.totalorder %s23, 1
    %p328 = scmp.ne.s32.totalorder %s323, %s325
    %p329 = scmp.eq.s32.totalorder %s23, 0
    %p330 = por %p328, %p329
    %p331 = scmp.ne.s32.totalorder %s323, %s325
    %p332 = scmp.eq.s32.totalorder %s28, 1
    %p333 = por %p331, %p332
    %p334 = scmp.ne.s32.totalorder %s325, %s326
    %p335 = scmp.eq.s32.totalorder %s28, 0
    %p336 = por %p334, %p335
    %p337 = scmp.ne.s32.totalorder %s325, %s326
    %p338 = scmp.eq.s32.totalorder %s29, 1
    %p339 = por %p337, %p338
    %p341 = scmp.ne.s32.totalorder %s326, %s340
    %p342 = scmp.eq.s32.totalorder %s29, 0
    %p343 = por %p341, %p342
    %s345 = sadd.s32 %s344, 1
    %p348 = scmp.eq.s32.totalorder %s23, 1
    %p349 = scmp.ne.s32.totalorder %s344, %s346
    %p350 = scmp.eq.s32.totalorder %s23, 0
    %p351 = por %p349, %p350
    %p352 = scmp.ne.s32.totalorder %s344, %s346
    %p353 = scmp.eq.s32.totalorder %s28, 1
    %p354 = por %p352, %p353
    %p355 = scmp.ne.s32.totalorder %s346, %s347
    %p356 = scmp.eq.s32.totalorder %s28, 0
    %p357 = por %p355, %p356
    %p358 = scmp.ne.s32.totalorder %s346, %s347
    %p359 = scmp.eq.s32.totalorder %s29, 1
    %p360 = por %p358, %p359
    %p362 = scmp.ne.s32.totalorder %s347, %s361
    %p363 = scmp.eq.s32.totalorder %s29, 0
    %p364 = por %p362, %p363
    %s365 = ssub.s32 %s30, %s42
    %s366 = ssub.s32 %s31, %s38
    %s367 = sor.u32 %s365, %s366
    %p368 = scmp.eq.s32.totalorder %s367, 0
    %s370 = sadd.s32 %s369, 1
    %s371 = scalar_select %p368, %s369, %s370
    %p374 = pneg %p368
    %p375 = scmp.eq.s32.totalorder %s23, 1
    %p376 = por %p374, %p375
    %p377 = scmp.ne.s32.totalorder %s369, %s372
    %p378 = scmp.eq.s32.totalorder %s23, 0
    %p379 = por %p377, %p378
    %p380 = scmp.ne.s32.totalorder %s369, %s372
    %p381 = scmp.eq.s32.totalorder %s28, 1
    %p382 = por %p380, %p381
    %p383 = scmp.ne.s32.totalorder %s372, %s373
    %p384 = scmp.eq.s32.totalorder %s28, 0
    %p385 = por %p383, %p384
    %p386 = scmp.ne.s32.totalorder %s372, %s373
    %p387 = scmp.eq.s32.totalorder %s29, 1
    %p388 = por %p386, %p387
    %p390 = scmp.ne.s32.totalorder %s373, %s389
    %p391 = scmp.eq.s32.totalorder %s29, 0
    %p392 = por %p390, %p391
    %s393 = ssub.s32 %s30, %s42
    %s394 = ssub.s32 %s31, %s38
    %s395 = sor.u32 %s393, %s394
    %p396 = scmp.eq.s32.totalorder %s395, 0
    %s398 = sadd.s32 %s397, 1
    %s399 = scalar_select %p396, %s397, %s398
    %p402 = pneg %p396
    %p403 = scmp.eq.s32.totalorder %s23, 1
    %p404 = por %p402, %p403
    %p405 = scmp.ne.s32.totalorder %s397, %s400
    %p406 = scmp.eq.s32.totalorder %s23, 0
    %p407 = por %p405, %p406
    %p408 = scmp.ne.s32.totalorder %s397, %s400
    %p409 = scmp.eq.s32.totalorder %s28, 1
    %p410 = por %p408, %p409
    %p411 = scmp.ne.s32.totalorder %s400, %s401
    %p412 = scmp.eq.s32.totalorder %s28, 0
    %p413 = por %p411, %p412
    %p414 = scmp.ne.s32.totalorder %s400, %s401
    %p415 = scmp.eq.s32.totalorder %s29, 1
    %p416 = por %p414, %p415
    %p418 = scmp.ne.s32.totalorder %s401, %s417
    %p419 = scmp.eq.s32.totalorder %s29, 0
    %p420 = por %p418, %p419
    %p421 = scmp.le.s32.totalorder 1, %s23
    %p422 = scmp.lt.s32.totalorder %s23, 3
    %p423 = pnand %p421, %p422
    %p424 = pneg %p423
    // Predicated region
    $region9: #{base_vq_forward.1} parent=5 // pred_check
      _
    $region10: #{base_vq_forward.1} parent=5 // pred_check_branch
      %426 = sbr.rel (%p423) target = $region12
    $region11: #{base_vq_forward.1} parent=5 // pred_region
      %s427 = ssub.s32 %s23, 1
      // Predicated region
      $region13: #{base_vq_forward.1} parent=11 // pred_check
        %p428 = pneg %p84
      $region14: #{base_vq_forward.1} parent=11 // pred_check_branch
        %430 = sbr.rel (%p428) target = $region16
      $region15: #{base_vq_forward.1} parent=11 // pred_region
        _
      $region16: #{base_vq_forward.1} parent=11 // pred_fallthru
        _
      // Predicated region
      $region17: #{base_vq_forward.1} parent=11 // pred_check
        %p431 = pneg %p105
      $region18: #{base_vq_forward.1} parent=11 // pred_check_branch
        %433 = sbr.rel (%p431) target = $region20
      $region19: #{base_vq_forward.1} parent=11 // pred_region
        _
      $region20: #{base_vq_forward.1} parent=11 // pred_fallthru
        _
      // Predicated region
      $region21: #{base_vq_forward.1} parent=11 // pred_check
        %p434 = pneg %p126
      $region22: #{base_vq_forward.1} parent=11 // pred_check_branch
        %436 = sbr.rel (%p434) target = $region24
      $region23: #{base_vq_forward.1} parent=11 // pred_region
        _
      $region24: #{base_vq_forward.1} parent=11 // pred_fallthru
        _
      // Predicated region
      $region25: #{base_vq_forward.1} parent=11 // pred_check
        %p437 = pneg %p147
      $region26: #{base_vq_forward.1} parent=11 // pred_check_branch
        %439 = sbr.rel (%p437) target = $region28
      $region27: #{base_vq_forward.1} parent=11 // pred_region
        _
      $region28: #{base_vq_forward.1} parent=11 // pred_fallthru
        _
      // Predicated region
      $region29: #{base_vq_forward.1} parent=11 // pred_check
        %p440 = pneg %p168
      $region30: #{base_vq_forward.1} parent=11 // pred_check_branch
        %442 = sbr.rel (%p440) target = $region32
      $region31: #{base_vq_forward.1} parent=11 // pred_region
        _
      $region32: #{base_vq_forward.1} parent=11 // pred_fallthru
        _
      // Predicated region
      $region33: #{base_vq_forward.1} parent=11 // pred_check
        %p443 = pneg %p189
      $region34: #{base_vq_forward.1} parent=11 // pred_check_branch
        %445 = sbr.rel (%p443) target = $region36
      $region35: #{base_vq_forward.1} parent=11 // pred_region
        _
      $region36: #{base_vq_forward.1} parent=11 // pred_fallthru
        _
      // Predicated region
      $region37: #{base_vq_forward.1} parent=11 // pred_check
        %p446 = pneg %p210
      $region38: #{base_vq_forward.1} parent=11 // pred_check_branch
        %448 = sbr.rel (%p446) target = $region40
      $region39: #{base_vq_forward.1} parent=11 // pred_region
        _
      $region40: #{base_vq_forward.1} parent=11 // pred_fallthru
        _
      // Predicated region
      $region41: #{base_vq_forward.1} parent=11 // pred_check
        %p449 = pneg %p231
      $region42: #{base_vq_forward.1} parent=11 // pred_check_branch
        %451 = sbr.rel (%p449) target = $region44
      $region43: #{base_vq_forward.1} parent=11 // pred_region
        _
      $region44: #{base_vq_forward.1} parent=11 // pred_fallthru
        _
      // Predicated region
      $region45: #{base_vq_forward.1} parent=11 // pred_check
        %p452 = pneg %p252
      $region46: #{base_vq_forward.1} parent=11 // pred_check_branch
        %454 = sbr.rel (%p452) target = $region48
      $region47: #{base_vq_forward.1} parent=11 // pred_region
        _
      $region48: #{base_vq_forward.1} parent=11 // pred_fallthru
        _
      // Predicated region
      $region49: #{base_vq_forward.1} parent=11 // pred_check
        %p455 = pneg %p273
      $region50: #{base_vq_forward.1} parent=11 // pred_check_branch
        %457 = sbr.rel (%p455) target = $region52
      $region51: #{base_vq_forward.1} parent=11 // pred_region
        _
      $region52: #{base_vq_forward.1} parent=11 // pred_fallthru
        _
      // Predicated region
      $region53: #{base_vq_forward.1} parent=11 // pred_check
        %p458 = pneg %p294
      $region54: #{base_vq_forward.1} parent=11 // pred_check_branch
        %460 = sbr.rel (%p458) target = $region56
      $region55: #{base_vq_forward.1} parent=11 // pred_region
        _
      $region56: #{base_vq_forward.1} parent=11 // pred_fallthru
        _
      // Predicated region
      $region57: #{base_vq_forward.1} parent=11 // pred_check
        %p461 = pneg %p315
      $region58: #{base_vq_forward.1} parent=11 // pred_check_branch
        %463 = sbr.rel (%p461) target = $region60
      $region59: #{base_vq_forward.1} parent=11 // pred_region
        _
      $region60: #{base_vq_forward.1} parent=11 // pred_fallthru
        _
      // Predicated region
      $region61: #{base_vq_forward.1} parent=11 // pred_check
        %p464 = pneg %p336
      $region62: #{base_vq_forward.1} parent=11 // pred_check_branch
        %466 = sbr.rel (%p464) target = $region64
      $region63: #{base_vq_forward.1} parent=11 // pred_region
        _
      $region64: #{base_vq_forward.1} parent=11 // pred_fallthru
        _
      // Predicated region
      $region65: #{base_vq_forward.1} parent=11 // pred_check
        %p467 = pneg %p357
      $region66: #{base_vq_forward.1} parent=11 // pred_check_branch
        %469 = sbr.rel (%p467) target = $region68
      $region67: #{base_vq_forward.1} parent=11 // pred_region
        _
      $region68: #{base_vq_forward.1} parent=11 // pred_fallthru
        _
    $region12: #{base_vq_forward.1} parent=5 // pred_fallthru
      _
    %p470 = scmp.lt.s32.totalorder %s23, 2
    // Predicated region
    $region69: #{base_vq_forward.1} parent=5 // pred_check
      %p471 = pneg %p470
    $region70: #{base_vq_forward.1} parent=5 // pred_check_branch
      %473 = sbr.rel (%p471) target = $region72
    $region71: #{base_vq_forward.1} parent=5 // pred_region
      // Predicated region
      $region73: #{base_vq_forward.1} parent=71 // pred_check
        %p474 = pneg %p57
      $region74: #{base_vq_forward.1} parent=71 // pred_check_branch
        %476 = sbr.rel (%p474) target = $region76
      $region75: #{base_vq_forward.1} parent=71 // pred_region
        %p477 = scmp.lt.s32.totalorder %s30, 1
        %s478 = scalar_select %p477, %s30, 1
        %p479 = scmp.lt.s32.totalorder %s31, 0
        %s480 = scalar_select %p479, %s31, 0
        %s481 = smul.addr %s478, 4
        %s482 = sadd.s32 %s480, %s481
        %s483 = smul.addr %s482, 8
        %s484 = scalar_lea.vmem %s0, %s483
      $region76: #{base_vq_forward.1} parent=71 // pred_fallthru
        _
    $region72: #{base_vq_forward.1} parent=5 // pred_fallthru
      _
    %p485 = scmp.le.s32.totalorder 1, %s23
    %p486 = scmp.lt.s32.totalorder %s23, 3
    %p487 = pnand %p485, %p486
    %p488 = pneg %p487
    // Predicated region
    $region77: #{base_vq_forward.1} parent=5 // pred_check
      _
    $region78: #{base_vq_forward.1} parent=5 // pred_check_branch
      %490 = sbr.rel (%p487) target = $region80
    $region79: #{base_vq_forward.1} parent=5 // pred_region
      %s491 = ssub.s32 %s23, 1
      %p492 = scmp.lt.s32.totalorder %s32, 1
      %s493 = scalar_select %p492, %s32, 1
      %p494 = scmp.lt.s32.totalorder %s33, 0
      %s495 = scalar_select %p494, %s33, 0
      %s496 = smul.addr %s493, 4
      %s497 = sadd.s32 %s495, %s496
      %s498 = smul.addr %s497, 8
      %s499 = scalar_lea.vmem %s0, %s498
      %p500 = pneg %p63
      %p501 = pneg %p60
      %p502 = pneg %p84
      %p503 = pneg %p81
      %p504 = pneg %p105
      %p505 = pneg %p102
      %p506 = pneg %p126
      %p507 = pneg %p123
      %p508 = pneg %p147
      %p509 = pneg %p144
      %p510 = pneg %p168
      %p511 = pneg %p165
      %p512 = pneg %p189
      %p513 = pneg %p186
      %p514 = pneg %p210
      %p515 = pneg %p207
      %p516 = pneg %p231
      %p517 = pneg %p228
      %p518 = pneg %p252
      %p519 = pneg %p249
      %p520 = pneg %p273
      %p521 = pneg %p270
      %p522 = pneg %p294
      %p523 = pneg %p291
      %p524 = pneg %p315
      %p525 = pneg %p312
      %p526 = pneg %p336
      %p527 = pneg %p333
      %p528 = pneg %p357
      %p529 = pneg %p354
      %p530 = pneg %p385
      %p531 = pneg %p382
      %s532 = smul.u32 8, %s33
      %p533 = scmp.lt.s32.totalorder %s32, 1
      %s534 = scalar_select %p533, %s32, 1
      %p535 = scmp.lt.s32.totalorder %s532, 7
      %s536 = scalar_select %p535, %s532, 7
      %s537 = smul.addr %s534, 8
      %s538 = sadd.s32 %s536, %s537
      %s539 = smul.addr %s538, 8
      %s540 = scalar_lea.vmem %s15, %s539
      %p541 = pneg %p413
      %p542 = pneg %p410
      %p543 = scmp.lt.s32.totalorder %s32, 1
      %s544 = scalar_select %p543, %s32, 1
      %p545 = scmp.lt.s32.totalorder %s33, 0
      %s546 = scalar_select %p545, %s33, 0
      %s547 = sadd.s32 %s546, %s544
      %s548 = scalar_lea.vmem %s16, %s547
      %p549 = scmp.lt.s32.totalorder %s32, 1
      %s550 = scalar_select %p549, %s32, 1
      %p551 = scmp.lt.s32.totalorder %s33, 0
      %s552 = scalar_select %p551, %s33, 0
      %s553 = smul.addr %s550, 4
      %s554 = sadd.s32 %s552, %s553
      %s555 = smul.addr %s554, 8
      %s556 = scalar_lea.vmem %s0, %s555
      %s557 = smul.u32 8, %s33
      %p558 = scmp.lt.s32.totalorder %s32, 1
      %s559 = scalar_select %p558, %s32, 1
      %p560 = scmp.lt.s32.totalorder %s557, 7
      %s561 = scalar_select %p560, %s557, 7
      %s562 = smul.addr %s559, 8
      %s563 = sadd.s32 %s561, %s562
      %s564 = smul.addr %s563, 8
      %s565 = scalar_lea.vmem %s15, %s564
      %s566 = smul.u32 8, %s33
      %p567 = scmp.lt.s32.totalorder %s32, 1
      %s568 = scalar_select %p567, %s32, 1
      %p569 = scmp.lt.s32.totalorder %s33, 0
      %s570 = scalar_select %p569, %s33, 0
      %s571 = sadd.s32 %s570, %s568
      %s572 = scalar_lea.vmem %s16, %s571
      %v573 = vld [vmem:[%s556] sm:$0xff]
      %v574 = vld [vmem:[%s556 + $0x8] sm:$0xff]
      %v575 = vld [vmem:[%s556 + $0x10] sm:$0xff]
      %v576 = vld [vmem:[%s556 + $0x18] sm:$0xff]
      %577 = vxpose.xlu0.b32.start [1/16] %v573, 128
      %578 = vxpose.xlu0.b32.cont [2/16] %v574, 128
      %579 = vxpose.xlu0.b32.cont [3/16] %v575, 128
      %580 = vxpose.xlu0.b32.cont [4/16] %v576, 128
      %581 = vxpose.xlu0.b32.cont [5/16] 0.0, 128
      %582 = vxpose.xlu0.b32.cont [6/16] 0.0, 128
      %583 = vxpose.xlu0.b32.cont [7/16] 0.0, 128
      %584 = vxpose.xlu0.b32.cont [8/16] 0.0, 128
      %585 = vxpose.xlu0.b32.cont [9/16] 0.0, 128
      %586 = vxpose.xlu0.b32.cont [10/16] 0.0, 128
      %587 = vxpose.xlu0.b32.cont [11/16] 0.0, 128
      %588 = vxpose.xlu0.b32.cont [12/16] 0.0, 128
      %589 = vxpose.xlu0.b32.cont [13/16] 0.0, 128
      %590 = vxpose.xlu0.b32.cont [14/16] 0.0, 128
      %591 = vxpose.xlu0.b32.cont [15/16] 0.0, 128
      %592 = vxpose.xlu0.b32.end [16/16] 0.0, 128
      %v593 = vpop.trf.xlu0
      %v594 = vpop.trf.xlu0
      %v595 = vpop.trf.xlu0
      %v596 = vpop.trf.xlu0
      %v597 = vpop.trf.xlu0
      %v598 = vpop.trf.xlu0
      %v599 = vpop.trf.xlu0
      %v600 = vpop.trf.xlu0
      %v601 = vpop.trf.xlu0
      %v602 = vpop.trf.xlu0
      %v603 = vpop.trf.xlu0
      %v604 = vpop.trf.xlu0
      %v605 = vpop.trf.xlu0
      %v606 = vpop.trf.xlu0
      %v607 = vpop.trf.xlu0
      %v608 = vpop.trf.xlu0
      %v609 = vld [vmem:[%s1] sm:$0xff]
      %v610 = vld [vmem:[%s1 + $0x8] sm:$0xff]
      %v611 = vld [vmem:[%s1 + $0x10] sm:$0xff]
      %v612 = vld [vmem:[%s1 + $0x18] sm:$0xff]
      %v613 = vld [vmem:[%s2] sm:$0x1]
      %v615 = vlaneseq
      %v616 = vshrl.u32 %v615, 7
      %v617 = vsub.s32 0, %v616
      %v618 = vrot.slane %v613, %v617
      %vm620 = vcmask 261120
      %v622 = vsel %vm620, %v593, 0
      %v625 = vsel %vm620, %v594, 0
      %v628 = vsel %vm620, %v595, 0
      %v631 = vsel %vm620, %v596, 0
      %v634 = vsel %vm620, %v597, 0
      %v637 = vsel %vm620, %v598, 0
      %v640 = vsel %vm620, %v599, 0
      %v643 = vsel %vm620, %v600, 0
      %645 = vmatprep.subr.mxu0 0.0
      %646 = vmatpush1.msra.mxu0 %v609
      %647 = vmatprep.subr.mxu0 0.0
      %648 = vmatpush1.msra.mxu0 %v610
      %649 = vmatprep.subr.mxu0 0.0
      %650 = vmatpush1.msra.mxu0 %v611
      %651 = vmatprep.subr.mxu0 0.0
      %652 = vmatpush1.msra.mxu0 %v612
      %653 = vmatprep.subr.mxu0 0.0
      %654 = vmatpush1.msra.mxu0 0.0
      %655 = vmatprep.subr.mxu0 0.0
      %656 = vmatpush1.msra.mxu0 0.0
      %657 = vmatprep.subr.mxu0 0.0
      %658 = vmatpush1.msra.mxu0 0.0
      %659 = vmatprep.subr.mxu0 0.0
      %660 = vmatpush1.msra.mxu0 0.0
      %661 = vmatprep.subr.mxu0 0.0
      %662 = vmatpush1.msra.mxu0 0.0
      %663 = vmatprep.subr.mxu0 0.0
      %664 = vmatpush1.msra.mxu0 0.0
      %665 = vmatprep.subr.mxu0 0.0
      %666 = vmatpush1.msra.mxu0 0.0
      %667 = vmatprep.subr.mxu0 0.0
      %668 = vmatpush1.msra.mxu0 0.0
      %669 = vmatprep.subr.mxu0 0.0
      %670 = vmatpush1.msra.mxu0 0.0
      %671 = vmatprep.subr.mxu0 0.0
      %672 = vmatpush1.msra.mxu0 0.0
      %673 = vmatprep.subr.mxu0 0.0
      %674 = vmatpush1.msra.mxu0 0.0
      %675 = vmatprep.subr.mxu0 0.0
      %676 = vmatpush1.msra.mxu0 0.0
      %677 = vmatprep.subr.mxu0 0.0
      %678 = vmatpush1.msra.mxu0 0.0
      %679 = vmatprep.subr.mxu0 0.0
      %680 = vmatpush1.msra.mxu0 0.0
      %681 = vmatprep.subr.mxu0 0.0
      %682 = vmatpush1.msra.mxu0 0.0
      %683 = vmatprep.subr.mxu0 0.0
      %684 = vmatpush1.msra.mxu0 0.0
      %685 = vmatprep.subr.mxu0 0.0
      %686 = vmatpush1.msra.mxu0 0.0
      %687 = vmatprep.subr.mxu0 0.0
      %688 = vmatpush1.msra.mxu0 0.0
      %689 = vmatprep.subr.mxu0 0.0
      %690 = vmatpush1.msra.mxu0 0.0
      %691 = vmatprep.subr.mxu0 0.0
      %692 = vmatpush1.msra.mxu0 0.0
      %693 = vmatprep.subr.mxu0 0.0
      %694 = vmatpush1.msra.mxu0 0.0
      %695 = vmatprep.subr.mxu0 0.0
      %696 = vmatpush1.msra.mxu0 0.0
      %697 = vmatprep.subr.mxu0 0.0
      %698 = vmatpush1.msra.mxu0 0.0
      %699 = vmatprep.subr.mxu0 0.0
      %700 = vmatpush1.msra.mxu0 0.0
      %701 = vmatprep.subr.mxu0 0.0
      %702 = vmatpush1.msra.mxu0 0.0
      %703 = vmatprep.subr.mxu0 0.0
      %704 = vmatpush1.msra.mxu0 0.0
      %705 = vmatprep.subr.mxu0 0.0
      %706 = vmatpush1.msra.mxu0 0.0
      %707 = vmatprep.subr.mxu0 0.0
      %708 = vmatpush1.msra.mxu0 0.0
      %709 = vmatprep.mubr.f32.mxu0 0.0
      %710 = vmatmul.mubr.f32.gmra.mrb[0].mxu0 %v622
      %v711 = vpop.f32.mrb[0].mxu0
      %v712 = vadd.f32 %v618, %v711
      %v713 = vpop.f32.mrb[0].mxu0
      %714 = vmatprep.mubr.f32.mxu0 0.0
      %715 = vmatmul.mubr.f32.gmra.mrb[0].mxu0 %v625
      %v716 = vpop.f32.mrb[0].mxu0
      %v717 = vadd.f32 %v618, %v716
      %v718 = vpop.f32.mrb[0].mxu0
      %719 = vmatprep.mubr.f32.mxu0 0.0
      %720 = vmatmul.mubr.f32.gmra.mrb[0].mxu0 %v628
      %v721 = vpop.f32.mrb[0].mxu0
      %v722 = vadd.f32 %v618, %v721
      %v723 = vpop.f32.mrb[0].mxu0
      %724 = vmatprep.mubr.f32.mxu0 0.0
      %725 = vmatmul.mubr.f32.gmra.mrb[0].mxu0 %v631
      %v726 = vpop.f32.mrb[0].mxu0
      %v727 = vadd.f32 %v618, %v726
      %v728 = vpop.f32.mrb[0].mxu0
      %729 = vmatprep.mubr.f32.mxu0 0.0
      %730 = vmatmul.mubr.f32.gmra.mrb[0].mxu0 %v634
      %v731 = vpop.f32.mrb[0].mxu0
      %v732 = vadd.f32 %v618, %v731
      %v733 = vpop.f32.mrb[0].mxu0
      %734 = vmatprep.mubr.f32.mxu0 0.0
      %735 = vmatmul.mubr.f32.gmra.mrb[0].mxu0 %v637
      %v736 = vpop.f32.mrb[0].mxu0
      %v737 = vadd.f32 %v618, %v736
      %v738 = vpop.f32.mrb[0].mxu0
      %739 = vmatprep.mubr.f32.mxu0 0.0
      %740 = vmatmul.mubr.f32.gmra.mrb[0].mxu0 %v640
      %v741 = vpop.f32.mrb[0].mxu0
      %v742 = vadd.f32 %v618, %v741
      %v743 = vpop.f32.mrb[0].mxu0
      %744 = vmatprep.mubr.f32.mxu0 0.0
      %745 = vmatmul.mubr.f32.gmra.mrb[0].mxu0 %v643
      %v746 = vpop.f32.mrb[0].mxu0
      %v747 = vadd.f32 %v618, %v746
      %v748 = vpop.f32.mrb[0].mxu0
      %749 = vdwg.mxu0
      %v750 = vmax.f32 %v712, 0.0
      %v751 = vmax.f32 %v717, 0.0
      %v752 = vmax.f32 %v722, 0.0
      %v753 = vmax.f32 %v727, 0.0
      %v754 = vmax.f32 %v732, 0.0
      %v755 = vmax.f32 %v737, 0.0
      %v756 = vmax.f32 %v742, 0.0
      %v757 = vmax.f32 %v747, 0.0
      %v758 = vld [vmem:[%s3] sm:$0xff]
      %v759 = vld [vmem:[%s3 + $0x8] sm:$0xff]
      %v760 = vld [vmem:[%s3 + $0x10] sm:$0xff]
      %v761 = vld [vmem:[%s3 + $0x18] sm:$0xff]
      %v762 = vld [vmem:[%s4] sm:$0x1]
      %v764 = vlaneseq
      %v765 = vshrl.u32 %v764, 7
      %v766 = vsub.s32 0, %v765
      %v767 = vrot.slane %v762, %v766
      %v770 = vsel %vm620, %v750, 0
      %v773 = vsel %vm620, %v751, 0
      %v776 = vsel %vm620, %v752, 0
      %v779 = vsel %vm620, %v753, 0
      %v782 = vsel %vm620, %v754, 0
      %v785 = vsel %vm620, %v755, 0
      %v788 = vsel %vm620, %v756, 0
      %v791 = vsel %vm620, %v757, 0
      %793 = vmatprep.subr.mxu0 0.0
      %794 = vmatpush1.msra.mxu0 %v758
      %795 = vmatprep.subr.mxu0 0.0
      %796 = vmatpush1.msra.mxu0 %v759
      %797 = vmatprep.subr.mxu0 0.0
      %798 = vmatpush1.msra.mxu0 %v760
      %799 = vmatprep.subr.mxu0 0.0
      %800 = vmatpush1.msra.mxu0 %v761
      %801 = vmatprep.subr.mxu0 0.0
      %802 = vmatpush1.msra.mxu0 0.0
      %803 = vmatprep.subr.mxu0 0.0
      %804 = vmatpush1.msra.mxu0 0.0
      %805 = vmatprep.subr.mxu0 0.0
      %806 = vmatpush1.msra.mxu0 0.0
      %807 = vmatprep.subr.mxu0 0.0
      %808 = vmatpush1.msra.mxu0 0.0
      %809 = vmatprep.subr.mxu0 0.0
      %810 = vmatpush1.msra.mxu0 0.0
      %811 = vmatprep.subr.mxu0 0.0
      %812 = vmatpush1.msra.mxu0 0.0
      %813 = vmatprep.subr.mxu0 0.0
      %814 = vmatpush1.msra.mxu0 0.0
      %815 = vmatprep.subr.mxu0 0.0
      %816 = vmatpush1.msra.mxu0 0.0
      %817 = vmatprep.subr.mxu0 0.0
      %818 = vmatpush1.msra.mxu0 0.0
      %819 = vmatprep.subr.mxu0 0.0
      %820 = vmatpush1.msra.mxu0 0.0
      %821 = vmatprep.subr.mxu0 0.0
      %822 = vmatpush1.msra.mxu0 0.0
      %823 = vmatprep.subr.mxu0 0.0
      %824 = vmatpush1.msra.mxu0 0.0
      %825 = vmatprep.subr.mxu0 0.0
      %826 = vmatpush1.msra.mxu0 0.0
      %827 = vmatprep.subr.mxu0 0.0
      %828 = vmatpush1.msra.mxu0 0.0
      %829 = vmatprep.subr.mxu0 0.0
      %830 = vmatpush1.msra.mxu0 0.0
      %831 = vmatprep.subr.mxu0 0.0
      %832 = vmatpush1.msra.mxu0 0.0
      %833 = vmatprep.subr.mxu0 0.0
      %834 = vmatpush1.msra.mxu0 0.0
      %835 = vmatprep.subr.mxu0 0.0
      %836 = vmatpush1.msra.mxu0 0.0
      %837 = vmatprep.subr.mxu0 0.0
      %838 = vmatpush1.msra.mxu0 0.0
      %839 = vmatprep.subr.mxu0 0.0
      %840 = vmatpush1.msra.mxu0 0.0
      %841 = vmatprep.subr.mxu0 0.0
      %842 = vmatpush1.msra.mxu0 0.0
      %843 = vmatprep.subr.mxu0 0.0
      %844 = vmatpush1.msra.mxu0 0.0
      %845 = vmatprep.subr.mxu0 0.0
      %846 = vmatpush1.msra.mxu0 0.0
      %847 = vmatprep.subr.mxu0 0.0
      %848 = vmatpush1.msra.mxu0 0.0
      %849 = vmatprep.subr.mxu0 0.0
      %850 = vmatpush1.msra.mxu0 0.0
      %851 = vmatprep.subr.mxu0 0.0
      %852 = vmatpush1.msra.mxu0 0.0
      %853 = vmatprep.subr.mxu0 0.0
      %854 = vmatpush1.msra.mxu0 0.0
      %855 = vmatprep.subr.mxu0 0.0
      %856 = vmatpush1.msra.mxu0 0.0
      %857 = vmatprep.mubr.f32.mxu0 0.0
      %858 = vmatmul.mubr.f32.gmra.mrb[0].mxu0 %v770
      %v859 = vpop.f32.mrb[0].mxu0
      %v860 = vadd.f32 %v767, %v859
      %v861 = vpop.f32.mrb[0].mxu0
      %862 = vmatprep.mubr.f32.mxu0 0.0
      %863 = vmatmul.mubr.f32.gmra.mrb[0].mxu0 %v773
      %v864 = vpop.f32.mrb[0].mxu0
      %v865 = vadd.f32 %v767, %v864
      %v866 = vpop.f32.mrb[0].mxu0
      %867 = vmatprep.mubr.f32.mxu0 0.0
      %868 = vmatmul.mubr.f32.gmra.mrb[0].mxu0 %v776
      %v869 = vpop.f32.mrb[0].mxu0
      %v870 = vadd.f32 %v767, %v869
      %v871 = vpop.f32.mrb[0].mxu0
      %872 = vmatprep.mubr.f32.mxu0 0.0
      %873 = vmatmul.mubr.f32.gmra.mrb[0].mxu0 %v779
      %v874 = vpop.f32.mrb[0].mxu0
      %v875 = vadd.f32 %v767, %v874
      %v876 = vpop.f32.mrb[0].mxu0
      %877 = vmatprep.mubr.f32.mxu0 0.0
      %878 = vmatmul.mubr.f32.gmra.mrb[0].mxu0 %v782
      %v879 = vpop.f32.mrb[0].mxu0
      %v880 = vadd.f32 %v767, %v879
      %v881 = vpop.f32.mrb[0].mxu0
      %882 = vmatprep.mubr.f32.mxu0 0.0
      %883 = vmatmul.mubr.f32.gmra.mrb[0].mxu0 %v785
      %v884 = vpop.f32.mrb[0].mxu0
      %v885 = vadd.f32 %v767, %v884
      %v886 = vpop.f32.mrb[0].mxu0
      %887 = vmatprep.mubr.f32.mxu0 0.0
      %888 = vmatmul.mubr.f32.gmra.mrb[0].mxu0 %v788
      %v889 = vpop.f32.mrb[0].mxu0
      %v890 = vadd.f32 %v767, %v889
      %v891 = vpop.f32.mrb[0].mxu0
      %892 = vmatprep.mubr.f32.mxu0 0.0
      %893 = vmatmul.mubr.f32.gmra.mrb[0].mxu0 %v791
      %v894 = vpop.f32.mrb[0].mxu0
      %v895 = vadd.f32 %v767, %v894
      %v896 = vpop.f32.mrb[0].mxu0
      %897 = vdwg.mxu0
      %vm898 = vcmask 64512
      %v899 = vsel %vm898, %v860, 0.0
      %900 = vadd.xlane.f32.xlu0 %v899
      %v901 = vpop.xlane.xlu0 %900
      %v902 = vsel %vm898, %v865, 0.0
      %903 = vadd.xlane.f32.xlu0 %v902
      %v904 = vpop.xlane.xlu0 %903
      %v905 = vsel %vm898, %v870, 0.0
      %906 = vadd.xlane.f32.xlu0 %v905
      %v907 = vpop.xlane.xlu0 %906
      %v908 = vsel %vm898, %v875, 0.0
      %909 = vadd.xlane.f32.xlu0 %v908
      %v910 = vpop.xlane.xlu0 %909
      %v911 = vsel %vm898, %v880, 0.0
      %912 = vadd.xlane.f32.xlu0 %v911
      %v913 = vpop.xlane.xlu0 %912
      %v914 = vsel %vm898, %v885, 0.0
      %915 = vadd.xlane.f32.xlu0 %v914
      %v916 = vpop.xlane.xlu0 %915
      %v917 = vsel %vm898, %v890, 0.0
      %918 = vadd.xlane.f32.xlu0 %v917
      %v919 = vpop.xlane.xlu0 %918
      %v920 = vsel %vm898, %v895, 0.0
      %921 = vadd.xlane.f32.xlu0 %v920
      %v922 = vpop.xlane.xlu0 %921
      %v923 = vrcp.pop 8.0
      %v924 = vmul.f32 %v901, %v923
      %v925 = vmul.f32 %v904, %v923
      %v926 = vmul.f32 %v907, %v923
      %v927 = vmul.f32 %v910, %v923
      %v928 = vmul.f32 %v913, %v923
      %v929 = vmul.f32 %v916, %v923
      %v930 = vmul.f32 %v919, %v923
      %v931 = vmul.f32 %v922, %v923
      %v932 = vsub.f32 %v860, %v924
      %v933 = vsub.f32 %v865, %v925
      %v934 = vsub.f32 %v870, %v926
      %v935 = vsub.f32 %v875, %v927
      %v936 = vsub.f32 %v880, %v928
      %v937 = vsub.f32 %v885, %v929
      %v938 = vsub.f32 %v890, %v930
      %v939 = vsub.f32 %v895, %v931
      %v940 = vmul.f32 %v932, %v932
      %v941 = vmul.f32 %v933, %v933
      %v942 = vmul.f32 %v934, %v934
      %v943 = vmul.f32 %v935, %v935
      %v944 = vmul.f32 %v936, %v936
      %v945 = vmul.f32 %v937, %v937
      %v946 = vmul.f32 %v938, %v938
      %v947 = vmul.f32 %v939, %v939
      %v948 = vsel %vm898, %v940, 0.0
      %949 = vadd.xlane.f32.xlu0 %v948
      %v950 = vpop.xlane.xlu0 %949
      %v951 = vsel %vm898, %v941, 0.0
      %952 = vadd.xlane.f32.xlu0 %v951
      %v953 = vpop.xlane.xlu0 %952
      %v954 = vsel %vm898, %v942, 0.0
      %955 = vadd.xlane.f32.xlu0 %v954
      %v956 = vpop.xlane.xlu0 %955
      %v957 = vsel %vm898, %v943, 0.0
      %958 = vadd.xlane.f32.xlu0 %v957
      %v959 = vpop.xlane.xlu0 %958
      %v960 = vsel %vm898, %v944, 0.0
      %961 = vadd.xlane.f32.xlu0 %v960
      %v962 = vpop.xlane.xlu0 %961
      %v963 = vsel %vm898, %v945, 0.0
      %964 = vadd.xlane.f32.xlu0 %v963
      %v965 = vpop.xlane.xlu0 %964
      %v966 = vsel %vm898, %v946, 0.0
      %967 = vadd.xlane.f32.xlu0 %v966
      %v968 = vpop.xlane.xlu0 %967
      %v969 = vsel %vm898, %v947, 0.0
      %970 = vadd.xlane.f32.xlu0 %v969
      %v971 = vpop.xlane.xlu0 %970
      %v972 = vmul.f32 %v950, %v923
      %v973 = vmul.f32 %v953, %v923
      %v974 = vmul.f32 %v956, %v923
      %v975 = vmul.f32 %v959, %v923
      %v976 = vmul.f32 %v962, %v923
      %v977 = vmul.f32 %v965, %v923
      %v978 = vmul.f32 %v968, %v923
      %v979 = vmul.f32 %v971, %v923
      %v980 = vadd.f32 %v972, 1e-05
      %v981 = vadd.f32 %v973, 1e-05
      %v982 = vadd.f32 %v974, 1e-05
      %v983 = vadd.f32 %v975, 1e-05
      %v984 = vadd.f32 %v976, 1e-05
      %v985 = vadd.f32 %v977, 1e-05
      %v986 = vadd.f32 %v978, 1e-05
      %v987 = vadd.f32 %v979, 1e-05
      %v988 = vrsqrt.pop %v980
      %v989 = vrsqrt.pop %v981
      %v990 = vrsqrt.pop %v982
      %v991 = vrsqrt.pop %v983
      %v992 = vrsqrt.pop %v984
      %v993 = vrsqrt.pop %v985
      %v994 = vrsqrt.pop %v986
      %v995 = vrsqrt.pop %v987
      %v996 = vmul.f32 %v932, %v988
      %v997 = vmul.f32 %v933, %v989
      %v998 = vmul.f32 %v934, %v990
      %v999 = vmul.f32 %v935, %v991
      %v1000 = vmul.f32 %v936, %v992
      %v1001 = vmul.f32 %v937, %v993
      %v1002 = vmul.f32 %v938, %v994
      %v1003 = vmul.f32 %v939, %v995
      %v1004 = vld [vmem:[%s5] sm:$0x1]
      %v1006 = vlaneseq
      %v1007 = vshrl.u32 %v1006, 7
      %v1008 = vsub.s32 0, %v1007
      %v1009 = vrot.slane %v1004, %v1008
      %v1011 = vmul.f32 %v996, %v1009
      %v1012 = vmul.f32 %v997, %v1009
      %v1013 = vmul.f32 %v998, %v1009
      %v1014 = vmul.f32 %v999, %v1009
      %v1015 = vmul.f32 %v1000, %v1009
      %v1016 = vmul.f32 %v1001, %v1009
      %v1017 = vmul.f32 %v1002, %v1009
      %v1018 = vmul.f32 %v1003, %v1009
      %v1019 = vld [vmem:[%s6] sm:$0x1]
      %v1021 = vlaneseq
      %v1022 = vshrl.u32 %v1021, 7
      %v1023 = vsub.s32 0, %v1022
      %v1024 = vrot.slane %v1019, %v1023
      %v1026 = vadd.f32 %v1011, %v1024
      %v1027 = vadd.f32 %v1012, %v1024
      %v1028 = vadd.f32 %v1013, %v1024
      %v1029 = vadd.f32 %v1014, %v1024
      %v1030 = vadd.f32 %v1015, %v1024
      %v1031 = vadd.f32 %v1016, %v1024
      %v1032 = vadd.f32 %v1017, %v1024
      %v1033 = vadd.f32 %v1018, %v1024
      %v1034 = vld [vmem:[%s7] sm:$0xff]
      %v1035 = vld [vmem:[%s7 + $0x8] sm:$0xff]
      %v1037 = vsel %vm898, %v1026, 0
      %v1040 = vsel %vm898, %v1027, 0
      %v1043 = vsel %vm898, %v1028, 0
      %v1046 = vsel %vm898, %v1029, 0
      %v1049 = vsel %vm898, %v1030, 0
      %v1052 = vsel %vm898, %v1031, 0
      %v1055 = vsel %vm898, %v1032, 0
      %v1058 = vsel %vm898, %v1033, 0
      %v1061 = vsel %vm898, %v1034, 0
      %v1064 = vsel %vm898, %v1035, 0
      %1066 = vmatprep.subr.mxu0 0.0
      %1067 = vmatpush1.xpose.msra.mxu0 %v1061
      %1068 = vmatprep.subr.mxu0 0.0
      %1069 = vmatpush1.xpose.msra.mxu0 %v1064
      %1070 = vmatprep.subr.mxu0 0.0
      %1071 = vmatpush1.xpose.msra.mxu0 0.0
      %1072 = vmatprep.subr.mxu0 0.0
      %1073 = vmatpush1.xpose.msra.mxu0 0.0
      %1074 = vmatprep.subr.mxu0 0.0
      %1075 = vmatpush1.xpose.msra.mxu0 0.0
      %1076 = vmatprep.subr.mxu0 0.0
      %1077 = vmatpush1.xpose.msra.mxu0 0.0
      %1078 = vmatprep.subr.mxu0 0.0
      %1079 = vmatpush1.xpose.msra.mxu0 0.0
      %1080 = vmatprep.subr.mxu0 0.0
      %1081 = vmatpush1.xpose.msra.mxu0 0.0
      %1082 = vmatprep.subr.mxu0 0.0
      %1083 = vmatpush1.xpose.msra.mxu0 0.0
      %1084 = vmatprep.subr.mxu0 0.0
      %1085 = vmatpush1.xpose.msra.mxu0 0.0
      %1086 = vmatprep.subr.mxu0 0.0
      %1087 = vmatpush1.xpose.msra.mxu0 0.0
      %1088 = vmatprep.subr.mxu0 0.0
      %1089 = vmatpush1.xpose.msra.mxu0 0.0
      %1090 = vmatprep.subr.mxu0 0.0
      %1091 = vmatpush1.xpose.msra.mxu0 0.0
      %1092 = vmatprep.subr.mxu0 0.0
      %1093 = vmatpush1.xpose.msra.mxu0 0.0
      %1094 = vmatprep.subr.mxu0 0.0
      %1095 = vmatpush1.xpose.msra.mxu0 0.0
      %1096 = vmatprep.subr.mxu0 0.0
      %1097 = vmatpush1.xpose.msra.mxu0 0.0
      %1098 = vmatprep.subr.mxu0 0.0
      %1099 = vmatpush1.xpose.msra.mxu0 0.0
      %1100 = vmatprep.subr.mxu0 0.0
      %1101 = vmatpush1.xpose.msra.mxu0 0.0
      %1102 = vmatprep.subr.mxu0 0.0
      %1103 = vmatpush1.xpose.msra.mxu0 0.0
      %1104 = vmatprep.subr.mxu0 0.0
      %1105 = vmatpush1.xpose.msra.mxu0 0.0
      %1106 = vmatprep.subr.mxu0 0.0
      %1107 = vmatpush1.xpose.msra.mxu0 0.0
      %1108 = vmatprep.subr.mxu0 0.0
      %1109 = vmatpush1.xpose.msra.mxu0 0.0
      %1110 = vmatprep.subr.mxu0 0.0
      %1111 = vmatpush1.xpose.msra.mxu0 0.0
      %1112 = vmatprep.subr.mxu0 0.0
      %1113 = vmatpush1.xpose.msra.mxu0 0.0
      %1114 = vmatprep.subr.mxu0 0.0
      %1115 = vmatpush1.xpose.msra.mxu0 0.0
      %1116 = vmatprep.subr.mxu0 0.0
      %1117 = vmatpush1.xpose.msra.mxu0 0.0
      %1118 = vmatprep.subr.mxu0 0.0
      %1119 = vmatpush1.xpose.msra.mxu0 0.0
      %1120 = vmatprep.subr.mxu0 0.0
      %1121 = vmatpush1.xpose.msra.mxu0 0.0
      %1122 = vmatprep.subr.mxu0 0.0
      %1123 = vmatpush1.xpose.msra.mxu0 0.0
      %1124 = vmatprep.subr.mxu0 0.0
      %1125 = vmatpush1.xpose.msra.mxu0 0.0
      %1126 = vmatprep.subr.mxu0 0.0
      %1127 = vmatpush1.xpose.msra.mxu0 0.0
      %1128 = vmatprep.subr.mxu0 0.0
      %1129 = vmatpush1.xpose.msra.mxu0 0.0
      %1130 = vmatprep.mubr.f32.mxu0 0.0
      %1131 = vmatmul.mubr.f32.gmra.mrb[0].mxu0 %v1037
      %v1132 = vpop.f32.mrb[0].mxu0
      %v1133 = vadd.f32 0.0, %v1132
      %v1134 = vpop.f32.mrb[0].mxu0
      %1135 = vmatprep.mubr.f32.mxu0 0.0
      %1136 = vmatmul.mubr.f32.gmra.mrb[0].mxu0 %v1040
      %v1137 = vpop.f32.mrb[0].mxu0
      %v1138 = vadd.f32 0.0, %v1137
      %v1139 = vpop.f32.mrb[0].mxu0
      %1140 = vmatprep.mubr.f32.mxu0 0.0
      %1141 = vmatmul.mubr.f32.gmra.mrb[0].mxu0 %v1043
      %v1142 = vpop.f32.mrb[0].mxu0
      %v1143 = vadd.f32 0.0, %v1142
      %v1144 = vpop.f32.mrb[0].mxu0
      %1145 = vmatprep.mubr.f32.mxu0 0.0
      %1146 = vmatmul.mubr.f32.gmra.mrb[0].mxu0 %v1046
      %v1147 = vpop.f32.mrb[0].mxu0
      %v1148 = vadd.f32 0.0, %v1147
      %v1149 = vpop.f32.mrb[0].mxu0
      %1150 = vmatprep.mubr.f32.mxu0 0.0
      %1151 = vmatmul.mubr.f32.gmra.mrb[0].mxu0 %v1049
      %v1152 = vpop.f32.mrb[0].mxu0
      %v1153 = vadd.f32 0.0, %v1152
      %v1154 = vpop.f32.mrb[0].mxu0
      %1155 = vmatprep.mubr.f32.mxu0 0.0
      %1156 = vmatmul.mubr.f32.gmra.mrb[0].mxu0 %v1052
      %v1157 = vpop.f32.mrb[0].mxu0
      %v1158 = vadd.f32 0.0, %v1157
      %v1159 = vpop.f32.mrb[0].mxu0
      %1160 = vmatprep.mubr.f32.mxu0 0.0
      %1161 = vmatmul.mubr.f32.gmra.mrb[0].mxu0 %v1055
      %v1162 = vpop.f32.mrb[0].mxu0
      %v1163 = vadd.f32 0.0, %v1162
      %v1164 = vpop.f32.mrb[0].mxu0
      %1165 = vmatprep.mubr.f32.mxu0 0.0
      %1166 = vmatmul.mubr.f32.gmra.mrb[0].mxu0 %v1058
      %v1167 = vpop.f32.mrb[0].mxu0
      %v1168 = vadd.f32 0.0, %v1167
      %v1169 = vpop.f32.mrb[0].mxu0
      %1170 = vdwg.mxu0
      %v1171 = vld [vmem:[%s8] sm:$0x1]
      %v1172 = vmul.f32 %v1133, 2.0
      %v1173 = vmul.f32 %v1138, 2.0
      %v1174 = vmul.f32 %v1143, 2.0
      %v1175 = vmul.f32 %v1148, 2.0
      %v1176 = vmul.f32 %v1153, 2.0
      %v1177 = vmul.f32 %v1158, 2.0
      %v1178 = vmul.f32 %v1163, 2.0
      %v1179 = vmul.f32 %v1168, 2.0
      %v1181 = vlaneseq
      %v1182 = vshrl.u32 %v1181, 7
      %v1183 = vsub.s32 0, %v1182
      %v1184 = vrot.slane %v1171, %v1183
      %v1186 = vsub.f32 %v1184, %v1172
      %v1187 = vsub.f32 %v1184, %v1173
      %v1188 = vsub.f32 %v1184, %v1174
      %v1189 = vsub.f32 %v1184, %v1175
      %v1190 = vsub.f32 %v1184, %v1176
      %v1191 = vsub.f32 %v1184, %v1177
      %v1192 = vsub.f32 %v1184, %v1178
      %v1193 = vsub.f32 %v1184, %v1179
      %v1194 = vlaneseq
      %v1195 = vand.u32 %v1194, 127
      %vm1196 = vcmask 130048
      %v1197 = vsel %vm1196, %v1186, inf
      %1198 = vmin.xlane.f32.xlu0 %v1197
      %v1199 = vpop.xlane.xlu0 %1198
      %v1200 = vsel %vm1196, %v1187, inf
      %1201 = vmin.xlane.f32.xlu0 %v1200
      %v1202 = vpop.xlane.xlu0 %1201
      %v1203 = vsel %vm1196, %v1188, inf
      %1204 = vmin.xlane.f32.xlu0 %v1203
      %v1205 = vpop.xlane.xlu0 %1204
      %v1206 = vsel %vm1196, %v1189, inf
      %1207 = vmin.xlane.f32.xlu0 %v1206
      %v1208 = vpop.xlane.xlu0 %1207
      %v1209 = vsel %vm1196, %v1190, inf
      %1210 = vmin.xlane.f32.xlu0 %v1209
      %v1211 = vpop.xlane.xlu0 %1210
      %v1212 = vsel %vm1196, %v1191, inf
      %1213 = vmin.xlane.f32.xlu0 %v1212
      %v1214 = vpop.xlane.xlu0 %1213
      %v1215 = vsel %vm1196, %v1192, inf
      %1216 = vmin.xlane.f32.xlu0 %v1215
      %v1217 = vpop.xlane.xlu0 %1216
      %v1218 = vsel %vm1196, %v1193, inf
      %1219 = vmin.xlane.f32.xlu0 %v1218
      %v1220 = vpop.xlane.xlu0 %1219
      %vm1221 = vcmp.le.f32.partialorder %v1186, %v1199
      %vm1222 = vcmp.le.f32.partialorder %v1187, %v1202
      %vm1223 = vcmp.le.f32.partialorder %v1188, %v1205
      %vm1224 = vcmp.le.f32.partialorder %v1189, %v1208
      %vm1225 = vcmp.le.f32.partialorder %v1190, %v1211
      %vm1226 = vcmp.le.f32.partialorder %v1191, %v1214
      %vm1227 = vcmp.le.f32.partialorder %v1192, %v1217
      %vm1228 = vcmp.le.f32.partialorder %v1193, %v1220
      %v1229 = vsel %vm1221, %v1195, 1073741824
      %v1230 = vsel %vm1222, %v1195, 1073741824
      %v1231 = vsel %vm1223, %v1195, 1073741824
      %v1232 = vsel %vm1224, %v1195, 1073741824
      %v1233 = vsel %vm1225, %v1195, 1073741824
      %v1234 = vsel %vm1226, %v1195, 1073741824
      %v1235 = vsel %vm1227, %v1195, 1073741824
      %v1236 = vsel %vm1228, %v1195, 1073741824
      %v1237 = vsel %vm1196, %v1229, 2147483647
      %v1238 = vand.u32 %v1237, 65535
      %v1239 = vshra.s32 %v1237, 16
      %v1240 = vcvt.s32.f32 %v1238
      %v1241 = vcvt.s32.f32 %v1239
      %1242 = vmin.xlane.f32.xlu0 %v1241
      %v1243 = vpop.xlane.xlu0 %1242
      %vm1244 = vcmp.eq.f32.partialorder %v1241, %v1243
      %v1245 = vsel %vm1244, %v1240, inf
      %1246 = vmin.xlane.f32.xlu0 %v1245
      %v1247 = vpop.xlane.xlu0 %1246
      %v1248 = vcvt.f32.s32 %v1247
      %v1249 = vcvt.f32.s32 %v1243
      %v1250 = vshll.u32 %v1249, 16
      %v1251 = vadd.s32 %v1250, %v1248
      %v1252 = vsel %vm1196, %v1230, 2147483647
      %v1253 = vand.u32 %v1252, 65535
      %v1254 = vshra.s32 %v1252, 16
      %v1255 = vcvt.s32.f32 %v1253
      %v1256 = vcvt.s32.f32 %v1254
      %1257 = vmin.xlane.f32.xlu0 %v1256
      %v1258 = vpop.xlane.xlu0 %1257
      %vm1259 = vcmp.eq.f32.partialorder %v1256, %v1258
      %v1260 = vsel %vm1259, %v1255, inf
      %1261 = vmin.xlane.f32.xlu0 %v1260
      %v1262 = vpop.xlane.xlu0 %1261
      %v1263 = vcvt.f32.s32 %v1262
      %v1264 = vcvt.f32.s32 %v1258
      %v1265 = vshll.u32 %v1264, 16
      %v1266 = vadd.s32 %v1265, %v1263
      %v1267 = vsel %vm1196, %v1231, 2147483647
      %v1268 = vand.u32 %v1267, 65535
      %v1269 = vshra.s32 %v1267, 16
      %v1270 = vcvt.s32.f32 %v1268
      %v1271 = vcvt.s32.f32 %v1269
      %1272 = vmin.xlane.f32.xlu0 %v1271
      %v1273 = vpop.xlane.xlu0 %1272
      %vm1274 = vcmp.eq.f32.partialorder %v1271, %v1273
      %v1275 = vsel %vm1274, %v1270, inf
      %1276 = vmin.xlane.f32.xlu0 %v1275
      %v1277 = vpop.xlane.xlu0 %1276
      %v1278 = vcvt.f32.s32 %v1277
      %v1279 = vcvt.f32.s32 %v1273
      %v1280 = vshll.u32 %v1279, 16
      %v1281 = vadd.s32 %v1280, %v1278
      %v1282 = vsel %vm1196, %v1232, 2147483647
      %v1283 = vand.u32 %v1282, 65535
      %v1284 = vshra.s32 %v1282, 16
      %v1285 = vcvt.s32.f32 %v1283
      %v1286 = vcvt.s32.f32 %v1284
      %1287 = vmin.xlane.f32.xlu0 %v1286
      %v1288 = vpop.xlane.xlu0 %1287
      %vm1289 = vcmp.eq.f32.partialorder %v1286, %v1288
      %v1290 = vsel %vm1289, %v1285, inf
      %1291 = vmin.xlane.f32.xlu0 %v1290
      %v1292 = vpop.xlane.xlu0 %1291
      %v1293 = vcvt.f32.s32 %v1292
      %v1294 = vcvt.f32.s32 %v1288
      %v1295 = vshll.u32 %v1294, 16
      %v1296 = vadd.s32 %v1295, %v1293
      %v1297 = vsel %vm1196, %v1233, 2147483647
      %v1298 = vand.u32 %v1297, 65535
      %v1299 = vshra.s32 %v1297, 16
      %v1300 = vcvt.s32.f32 %v1298
      %v1301 = vcvt.s32.f32 %v1299
      %1302 = vmin.xlane.f32.xlu0 %v1301
      %v1303 = vpop.xlane.xlu0 %1302
      %vm1304 = vcmp.eq.f32.partialorder %v1301, %v1303
      %v1305 = vsel %vm1304, %v1300, inf
      %1306 = vmin.xlane.f32.xlu0 %v1305
      %v1307 = vpop.xlane.xlu0 %1306
      %v1308 = vcvt.f32.s32 %v1307
      %v1309 = vcvt.f32.s32 %v1303
      %v1310 = vshll.u32 %v1309, 16
      %v1311 = vadd.s32 %v1310, %v1308
      %v1312 = vsel %vm1196, %v1234, 2147483647
      %v1313 = vand.u32 %v1312, 65535
      %v1314 = vshra.s32 %v1312, 16
      %v1315 = vcvt.s32.f32 %v1313
      %v1316 = vcvt.s32.f32 %v1314
      %1317 = vmin.xlane.f32.xlu0 %v1316
      %v1318 = vpop.xlane.xlu0 %1317
      %vm1319 = vcmp.eq.f32.partialorder %v1316, %v1318
      %v1320 = vsel %vm1319, %v1315, inf
      %1321 = vmin.xlane.f32.xlu0 %v1320
      %v1322 = vpop.xlane.xlu0 %1321
      %v1323 = vcvt.f32.s32 %v1322
      %v1324 = vcvt.f32.s32 %v1318
      %v1325 = vshll.u32 %v1324, 16
      %v1326 = vadd.s32 %v1325, %v1323
      %v1327 = vsel %vm1196, %v1235, 2147483647
      %v1328 = vand.u32 %v1327, 65535
      %v1329 = vshra.s32 %v1327, 16
      %v1330 = vcvt.s32.f32 %v1328
      %v1331 = vcvt.s32.f32 %v1329
      %1332 = vmin.xlane.f32.xlu0 %v1331
      %v1333 = vpop.xlane.xlu0 %1332
      %vm1334 = vcmp.eq.f32.partialorder %v1331, %v1333
      %v1335 = vsel %vm1334, %v1330, inf
      %1336 = vmin.xlane.f32.xlu0 %v1335
      %v1337 = vpop.xlane.xlu0 %1336
      %v1338 = vcvt.f32.s32 %v1337
      %v1339 = vcvt.f32.s32 %v1333
      %v1340 = vshll.u32 %v1339, 16
      %v1341 = vadd.s32 %v1340, %v1338
      %v1342 = vsel %vm1196, %v1236, 2147483647
      %v1343 = vand.u32 %v1342, 65535
      %v1344 = vshra.s32 %v1342, 16
      %v1345 = vcvt.s32.f32 %v1343
      %v1346 = vcvt.s32.f32 %v1344
      %1347 = vmin.xlane.f32.xlu0 %v1346
      %v1348 = vpop.xlane.xlu0 %1347
      %vm1349 = vcmp.eq.f32.partialorder %v1346, %v1348
      %v1350 = vsel %vm1349, %v1345, inf
      %1351 = vmin.xlane.f32.xlu0 %v1350
      %v1352 = vpop.xlane.xlu0 %1351
      %v1353 = vcvt.f32.s32 %v1352
      %v1354 = vcvt.f32.s32 %v1348
      %v1355 = vshll.u32 %v1354, 16
      %v1356 = vadd.s32 %v1355, %v1353
      %vm1357 = vcmp.eq.s32.totalorder %v1195, %v1251
      %vm1358 = vcmp.eq.s32.totalorder %v1195, %v1266
      %vm1359 = vcmp.eq.s32.totalorder %v1195, %v1281
      %vm1360 = vcmp.eq.s32.totalorder %v1195, %v1296
      %vm1361 = vcmp.eq.s32.totalorder %v1195, %v1311
      %vm1362 = vcmp.eq.s32.totalorder %v1195, %v1326
      %vm1363 = vcmp.eq.s32.totalorder %v1195, %v1341
      %vm1364 = vcmp.eq.s32.totalorder %v1195, %v1356
      %v1365 = vsel %vm1357, 1, 0
      %v1366 = vsel %vm1358, 1, 0
      %v1367 = vsel %vm1359, 1, 0
      %v1368 = vsel %vm1360, 1, 0
      %v1369 = vsel %vm1361, 1, 0
      %v1370 = vsel %vm1362, 1, 0
      %v1371 = vsel %vm1363, 1, 0
      %v1372 = vsel %vm1364, 1, 0
      %v1373 = vcvt.s32.f32 %v1365
      %v1374 = vcvt.s32.f32 %v1366
      %v1375 = vcvt.s32.f32 %v1367
      %v1376 = vcvt.s32.f32 %v1368
      %v1377 = vcvt.s32.f32 %v1369
      %v1378 = vcvt.s32.f32 %v1370
      %v1379 = vcvt.s32.f32 %v1371
      %v1380 = vcvt.s32.f32 %v1372
      %v1382 = vsel %vm1196, %v1373, 0
      %v1385 = vsel %vm1196, %v1374, 0
      %v1388 = vsel %vm1196, %v1375, 0
      %v1391 = vsel %vm1196, %v1376, 0
      %v1394 = vsel %vm1196, %v1377, 0
      %v1397 = vsel %vm1196, %v1378, 0
      %v1400 = vsel %vm1196, %v1379, 0
      %v1403 = vsel %vm1196, %v1380, 0
      %1405 = vmatprep.subr.mxu0 0.0
      %1406 = vmatpush1.msra.mxu0 %v1034
      %1407 = vmatprep.subr.mxu0 0.0
      %1408 = vmatpush1.msra.mxu0 %v1035
      %1409 = vmatprep.subr.mxu0 0.0
      %1410 = vmatpush1.msra.mxu0 0.0
      %1411 = vmatprep.subr.mxu0 0.0
      %1412 = vmatpush1.msra.mxu0 0.0
      %1413 = vmatprep.subr.mxu0 0.0
      %1414 = vmatpush1.msra.mxu0 0.0
      %1415 = vmatprep.subr.mxu0 0.0
      %1416 = vmatpush1.msra.mxu0 0.0
      %1417 = vmatprep.subr.mxu0 0.0
      %1418 = vmatpush1.msra.mxu0 0.0
      %1419 = vmatprep.subr.mxu0 0.0
      %1420 = vmatpush1.msra.mxu0 0.0
      %1421 = vmatprep.subr.mxu0 0.0
      %1422 = vmatpush1.msra.mxu0 0.0
      %1423 = vmatprep.subr.mxu0 0.0
      %1424 = vmatpush1.msra.mxu0 0.0
      %1425 = vmatprep.subr.mxu0 0.0
      %1426 = vmatpush1.msra.mxu0 0.0
      %1427 = vmatprep.subr.mxu0 0.0
      %1428 = vmatpush1.msra.mxu0 0.0
      %1429 = vmatprep.subr.mxu0 0.0
      %1430 = vmatpush1.msra.mxu0 0.0
      %1431 = vmatprep.subr.mxu0 0.0
      %1432 = vmatpush1.msra.mxu0 0.0
      %1433 = vmatprep.subr.mxu0 0.0
      %1434 = vmatpush1.msra.mxu0 0.0
      %1435 = vmatprep.subr.mxu0 0.0
      %1436 = vmatpush1.msra.mxu0 0.0
      %1437 = vmatprep.subr.mxu0 0.0
      %1438 = vmatpush1.msra.mxu0 0.0
      %1439 = vmatprep.subr.mxu0 0.0
      %1440 = vmatpush1.msra.mxu0 0.0
      %1441 = vmatprep.subr.mxu0 0.0
      %1442 = vmatpush1.msra.mxu0 0.0
      %1443 = vmatprep.subr.mxu0 0.0
      %1444 = vmatpush1.msra.mxu0 0.0
      %1445 = vmatprep.subr.mxu0 0.0
      %1446 = vmatpush1.msra.mxu0 0.0
      %1447 = vmatprep.subr.mxu0 0.0
      %1448 = vmatpush1.msra.mxu0 0.0
      %1449 = vmatprep.subr.mxu0 0.0
      %1450 = vmatpush1.msra.mxu0 0.0
      %1451 = vmatprep.subr.mxu0 0.0
      %1452 = vmatpush1.msra.mxu0 0.0
      %1453 = vmatprep.subr.mxu0 0.0
      %1454 = vmatpush1.msra.mxu0 0.0
      %1455 = vmatprep.subr.mxu0 0.0
      %1456 = vmatpush1.msra.mxu0 0.0
      %1457 = vmatprep.subr.mxu0 0.0
      %1458 = vmatpush1.msra.mxu0 0.0
      %1459 = vmatprep.subr.mxu0 0.0
      %1460 = vmatpush1.msra.mxu0 0.0
      %1461 = vmatprep.subr.mxu0 0.0
      %1462 = vmatpush1.msra.mxu0 0.0
      %1463 = vmatprep.subr.mxu0 0.0
      %1464 = vmatpush1.msra.mxu0 0.0
      %1465 = vmatprep.subr.mxu0 0.0
      %1466 = vmatpush1.msra.mxu0 0.0
      %1467 = vmatprep.subr.mxu0 0.0
      %1468 = vmatpush1.msra.mxu0 0.0
      %1469 = vmatprep.mubr.f32.mxu0 0.0
      %1470 = vmatmul.mubr.f32.gmra.mrb[0].mxu0 %v1382
      %v1471 = vpop.f32.mrb[0].mxu0
      %v1472 = vadd.f32 0.0, %v1471
      %v1473 = vpop.f32.mrb[0].mxu0
      %1474 = vmatprep.mubr.f32.mxu0 0.0
      %1475 = vmatmul.mubr.f32.gmra.mrb[0].mxu0 %v1385
      %v1476 = vpop.f32.mrb[0].mxu0
      %v1477 = vadd.f32 0.0, %v1476
      %v1478 = vpop.f32.mrb[0].mxu0
      %1479 = vmatprep.mubr.f32.mxu0 0.0
      %1480 = vmatmul.mubr.f32.gmra.mrb[0].mxu0 %v1388
      %v1481 = vpop.f32.mrb[0].mxu0
      %v1482 = vadd.f32 0.0, %v1481
      %v1483 = vpop.f32.mrb[0].mxu0
      %1484 = vmatprep.mubr.f32.mxu0 0.0
      %1485 = vmatmul.mubr.f32.gmra.mrb[0].mxu0 %v1391
      %v1486 = vpop.f32.mrb[0].mxu0
      %v1487 = vadd.f32 0.0, %v1486
      %v1488 = vpop.f32.mrb[0].mxu0
      %1489 = vmatprep.mubr.f32.mxu0 0.0
      %1490 = vmatmul.mubr.f32.gmra.mrb[0].mxu0 %v1394
      %v1491 = vpop.f32.mrb[0].mxu0
      %v1492 = vadd.f32 0.0, %v1491
      %v1493 = vpop.f32.mrb[0].mxu0
      %1494 = vmatprep.mubr.f32.mxu0 0.0
      %1495 = vmatmul.mubr.f32.gmra.mrb[0].mxu0 %v1397
      %v1496 = vpop.f32.mrb[0].mxu0
      %v1497 = vadd.f32 0.0, %v1496
      %v1498 = vpop.f32.mrb[0].mxu0
      %1499 = vmatprep.mubr.f32.mxu0 0.0
      %1500 = vmatmul.mubr.f32.gmra.mrb[0].mxu0 %v1400
      %v1501 = vpop.f32.mrb[0].mxu0
      %v1502 = vadd.f32 0.0, %v1501
      %v1503 = vpop.f32.mrb[0].mxu0
      %1504 = vmatprep.mubr.f32.mxu0 0.0
      %1505 = vmatmul.mubr.f32.gmra.mrb[0].mxu0 %v1403
      %v1506 = vpop.f32.mrb[0].mxu0
      %v1507 = vadd.f32 0.0, %v1506
      %v1508 = vpop.f32.mrb[0].mxu0
      %1509 = vdwg.mxu0
      %v1510 = vld [vmem:[%s9] sm:$0xff]
      %v1511 = vld [vmem:[%s10] sm:$0x1]
      %v1513 = vlaneseq
      %v1514 = vshrl.u32 %v1513, 7
      %v1515 = vsub.s32 0, %v1514
      %v1516 = vrot.slane %v1511, %v1515
      %v1519 = vsel %vm898, %v1472, 0
      %v1522 = vsel %vm898, %v1477, 0
      %v1525 = vsel %vm898, %v1482, 0
      %v1528 = vsel %vm898, %v1487, 0
      %v1531 = vsel %vm898, %v1492, 0
      %v1534 = vsel %vm898, %v1497, 0
      %v1537 = vsel %vm898, %v1502, 0
      %v1540 = vsel %vm898, %v1507, 0
      %1542 = vmatprep.subr.mxu0 0.0
      %1543 = vmatpush1.msra.mxu0 %v1510
      %1544 = vmatprep.subr.mxu0 0.0
      %1545 = vmatpush1.msra.mxu0 0.0
      %1546 = vmatprep.subr.mxu0 0.0
      %1547 = vmatpush1.msra.mxu0 0.0
      %1548 = vmatprep.subr.mxu0 0.0
      %1549 = vmatpush1.msra.mxu0 0.0
      %1550 = vmatprep.subr.mxu0 0.0
      %1551 = vmatpush1.msra.mxu0 0.0
      %1552 = vmatprep.subr.mxu0 0.0
      %1553 = vmatpush1.msra.mxu0 0.0
      %1554 = vmatprep.subr.mxu0 0.0
      %1555 = vmatpush1.msra.mxu0 0.0
      %1556 = vmatprep.subr.mxu0 0.0
      %1557 = vmatpush1.msra.mxu0 0.0
      %1558 = vmatprep.subr.mxu0 0.0
      %1559 = vmatpush1.msra.mxu0 0.0
      %1560 = vmatprep.subr.mxu0 0.0
      %1561 = vmatpush1.msra.mxu0 0.0
      %1562 = vmatprep.subr.mxu0 0.0
      %1563 = vmatpush1.msra.mxu0 0.0
      %1564 = vmatprep.subr.mxu0 0.0
      %1565 = vmatpush1.msra.mxu0 0.0
      %1566 = vmatprep.subr.mxu0 0.0
      %1567 = vmatpush1.msra.mxu0 0.0
      %1568 = vmatprep.subr.mxu0 0.0
      %1569 = vmatpush1.msra.mxu0 0.0
      %1570 = vmatprep.subr.mxu0 0.0
      %1571 = vmatpush1.msra.mxu0 0.0
      %1572 = vmatprep.subr.mxu0 0.0
      %1573 = vmatpush1.msra.mxu0 0.0
      %1574 = vmatprep.subr.mxu0 0.0
      %1575 = vmatpush1.msra.mxu0 0.0
      %1576 = vmatprep.subr.mxu0 0.0
      %1577 = vmatpush1.msra.mxu0 0.0
      %1578 = vmatprep.subr.mxu0 0.0
      %1579 = vmatpush1.msra.mxu0 0.0
      %1580 = vmatprep.subr.mxu0 0.0
      %1581 = vmatpush1.msra.mxu0 0.0
      %1582 = vmatprep.subr.mxu0 0.0
      %1583 = vmatpush1.msra.mxu0 0.0
      %1584 = vmatprep.subr.mxu0 0.0
      %1585 = vmatpush1.msra.mxu0 0.0
      %1586 = vmatprep.subr.mxu0 0.0
      %1587 = vmatpush1.msra.mxu0 0.0
      %1588 = vmatprep.subr.mxu0 0.0
      %1589 = vmatpush1.msra.mxu0 0.0
      %1590 = vmatprep.subr.mxu0 0.0
      %1591 = vmatpush1.msra.mxu0 0.0
      %1592 = vmatprep.subr.mxu0 0.0
      %1593 = vmatpush1.msra.mxu0 0.0
      %1594 = vmatprep.subr.mxu0 0.0
      %1595 = vmatpush1.msra.mxu0 0.0
      %1596 = vmatprep.subr.mxu0 0.0
      %1597 = vmatpush1.msra.mxu0 0.0
      %1598 = vmatprep.subr.mxu0 0.0
      %1599 = vmatpush1.msra.mxu0 0.0
      %1600 = vmatprep.subr.mxu0 0.0
      %1601 = vmatpush1.msra.mxu0 0.0
      %1602 = vmatprep.subr.mxu0 0.0
      %1603 = vmatpush1.msra.mxu0 0.0
      %1604 = vmatprep.subr.mxu0 0.0
      %1605 = vmatpush1.msra.mxu0 0.0
      %1606 = vmatprep.mubr.f32.mxu0 0.0
      %1607 = vmatmul.mubr.f32.gmra.mrb[0].mxu0 %v1519
      %v1608 = vpop.f32.mrb[0].mxu0
      %v1609 = vadd.f32 %v1516, %v1608
      %v1610 = vpop.f32.mrb[0].mxu0
      %1611 = vmatprep.mubr.f32.mxu0 0.0
      %1612 = vmatmul.mubr.f32.gmra.mrb[0].mxu0 %v1522
      %v1613 = vpop.f32.mrb[0].mxu0
      %v1614 = vadd.f32 %v1516, %v1613
      %v1615 = vpop.f32.mrb[0].mxu0
      %1616 = vmatprep.mubr.f32.mxu0 0.0
      %1617 = vmatmul.mubr.f32.gmra.mrb[0].mxu0 %v1525
      %v1618 = vpop.f32.mrb[0].mxu0
      %v1619 = vadd.f32 %v1516, %v1618
      %v1620 = vpop.f32.mrb[0].mxu0
      %1621 = vmatprep.mubr.f32.mxu0 0.0
      %1622 = vmatmul.mubr.f32.gmra.mrb[0].mxu0 %v1528
      %v1623 = vpop.f32.mrb[0].mxu0
      %v1624 = vadd.f32 %v1516, %v1623
      %v1625 = vpop.f32.mrb[0].mxu0
      %1626 = vmatprep.mubr.f32.mxu0 0.0
      %1627 = vmatmul.mubr.f32.gmra.mrb[0].mxu0 %v1531
      %v1628 = vpop.f32.mrb[0].mxu0
      %v1629 = vadd.f32 %v1516, %v1628
      %v1630 = vpop.f32.mrb[0].mxu0
      %1631 = vmatprep.mubr.f32.mxu0 0.0
      %1632 = vmatmul.mubr.f32.gmra.mrb[0].mxu0 %v1534
      %v1633 = vpop.f32.mrb[0].mxu0
      %v1634 = vadd.f32 %v1516, %v1633
      %v1635 = vpop.f32.mrb[0].mxu0
      %1636 = vmatprep.mubr.f32.mxu0 0.0
      %1637 = vmatmul.mubr.f32.gmra.mrb[0].mxu0 %v1537
      %v1638 = vpop.f32.mrb[0].mxu0
      %v1639 = vadd.f32 %v1516, %v1638
      %v1640 = vpop.f32.mrb[0].mxu0
      %1641 = vmatprep.mubr.f32.mxu0 0.0
      %1642 = vmatmul.mubr.f32.gmra.mrb[0].mxu0 %v1540
      %v1643 = vpop.f32.mrb[0].mxu0
      %v1644 = vadd.f32 %v1516, %v1643
      %v1645 = vpop.f32.mrb[0].mxu0
      %1646 = vdwg.mxu0
      %v1647 = vmax.f32 %v1609, 0.0
      %v1648 = vmax.f32 %v1614, 0.0
      %v1649 = vmax.f32 %v1619, 0.0
      %v1650 = vmax.f32 %v1624, 0.0
      %v1651 = vmax.f32 %v1629, 0.0
      %v1652 = vmax.f32 %v1634, 0.0
      %v1653 = vmax.f32 %v1639, 0.0
      %v1654 = vmax.f32 %v1644, 0.0
      %v1655 = vld [vmem:[%s11] sm:$0xff]
      %v1656 = vld [vmem:[%s11 + $0x8] sm:$0xff]
      %v1657 = vld [vmem:[%s11 + $0x10] sm:$0xff]
      %v1658 = vld [vmem:[%s11 + $0x18] sm:$0xff]
      %v1659 = vld [vmem:[%s12] sm:$0x1]
      %v1661 = vlaneseq
      %v1662 = vshrl.u32 %v1661, 7
      %v1663 = vsub.s32 0, %v1662
      %v1664 = vrot.slane %v1659, %v1663
      %v1667 = vsel %vm620, %v1647, 0
      %v1670 = vsel %vm620, %v1648, 0
      %v1673 = vsel %vm620, %v1649, 0
      %v1676 = vsel %vm620, %v1650, 0
      %v1679 = vsel %vm620, %v1651, 0
      %v1682 = vsel %vm620, %v1652, 0
      %v1685 = vsel %vm620, %v1653, 0
      %v1688 = vsel %vm620, %v1654, 0
      %1690 = vmatprep.subr.mxu0 0.0
      %1691 = vmatpush1.msra.mxu0 %v1655
      %1692 = vmatprep.subr.mxu0 0.0
      %1693 = vmatpush1.msra.mxu0 %v1656
      %1694 = vmatprep.subr.mxu0 0.0
      %1695 = vmatpush1.msra.mxu0 %v1657
      %1696 = vmatprep.subr.mxu0 0.0
      %1697 = vmatpush1.msra.mxu0 %v1658
      %1698 = vmatprep.subr.mxu0 0.0
      %1699 = vmatpush1.msra.mxu0 0.0
      %1700 = vmatprep.subr.mxu0 0.0
      %1701 = vmatpush1.msra.mxu0 0.0
      %1702 = vmatprep.subr.mxu0 0.0
      %1703 = vmatpush1.msra.mxu0 0.0
      %1704 = vmatprep.subr.mxu0 0.0
      %1705 = vmatpush1.msra.mxu0 0.0
      %1706 = vmatprep.subr.mxu0 0.0
      %1707 = vmatpush1.msra.mxu0 0.0
      %1708 = vmatprep.subr.mxu0 0.0
      %1709 = vmatpush1.msra.mxu0 0.0
      %1710 = vmatprep.subr.mxu0 0.0
      %1711 = vmatpush1.msra.mxu0 0.0
      %1712 = vmatprep.subr.mxu0 0.0
      %1713 = vmatpush1.msra.mxu0 0.0
      %1714 = vmatprep.subr.mxu0 0.0
      %1715 = vmatpush1.msra.mxu0 0.0
      %1716 = vmatprep.subr.mxu0 0.0
      %1717 = vmatpush1.msra.mxu0 0.0
      %1718 = vmatprep.subr.mxu0 0.0
      %1719 = vmatpush1.msra.mxu0 0.0
      %1720 = vmatprep.subr.mxu0 0.0
      %1721 = vmatpush1.msra.mxu0 0.0
      %1722 = vmatprep.subr.mxu0 0.0
      %1723 = vmatpush1.msra.mxu0 0.0
      %1724 = vmatprep.subr.mxu0 0.0
      %1725 = vmatpush1.msra.mxu0 0.0
      %1726 = vmatprep.subr.mxu0 0.0
      %1727 = vmatpush1.msra.mxu0 0.0
      %1728 = vmatprep.subr.mxu0 0.0
      %1729 = vmatpush1.msra.mxu0 0.0
      %1730 = vmatprep.subr.mxu0 0.0
      %1731 = vmatpush1.msra.mxu0 0.0
      %1732 = vmatprep.subr.mxu0 0.0
      %1733 = vmatpush1.msra.mxu0 0.0
      %1734 = vmatprep.subr.mxu0 0.0
      %1735 = vmatpush1.msra.mxu0 0.0
      %1736 = vmatprep.subr.mxu0 0.0
      %1737 = vmatpush1.msra.mxu0 0.0
      %1738 = vmatprep.subr.mxu0 0.0
      %1739 = vmatpush1.msra.mxu0 0.0
      %1740 = vmatprep.subr.mxu0 0.0
      %1741 = vmatpush1.msra.mxu0 0.0
      %1742 = vmatprep.subr.mxu0 0.0
      %1743 = vmatpush1.msra.mxu0 0.0
      %1744 = vmatprep.subr.mxu0 0.0
      %1745 = vmatpush1.msra.mxu0 0.0
      %1746 = vmatprep.subr.mxu0 0.0
      %1747 = vmatpush1.msra.mxu0 0.0
      %1748 = vmatprep.subr.mxu0 0.0
      %1749 = vmatpush1.msra.mxu0 0.0
      %1750 = vmatprep.subr.mxu0 0.0
      %1751 = vmatpush1.msra.mxu0 0.0
      %1752 = vmatprep.subr.mxu0 0.0
      %1753 = vmatpush1.msra.mxu0 0.0
      %1754 = vmatprep.mubr.f32.mxu0 0.0
      %1755 = vmatmul.mubr.f32.gmra.mrb[0].mxu0 %v1667
      %v1756 = vpop.f32.mrb[0].mxu0
      %v1757 = vadd.f32 %v1664, %v1756
      %v1758 = vpop.f32.mrb[0].mxu0
      %1759 = vmatprep.mubr.f32.mxu0 0.0
      %1760 = vmatmul.mubr.f32.gmra.mrb[0].mxu0 %v1670
      %v1761 = vpop.f32.mrb[0].mxu0
      %v1762 = vadd.f32 %v1664, %v1761
      %v1763 = vpop.f32.mrb[0].mxu0
      %1764 = vmatprep.mubr.f32.mxu0 0.0
      %1765 = vmatmul.mubr.f32.gmra.mrb[0].mxu0 %v1673
      %v1766 = vpop.f32.mrb[0].mxu0
      %v1767 = vadd.f32 %v1664, %v1766
      %v1768 = vpop.f32.mrb[0].mxu0
      %1769 = vmatprep.mubr.f32.mxu0 0.0
      %1770 = vmatmul.mubr.f32.gmra.mrb[0].mxu0 %v1676
      %v1771 = vpop.f32.mrb[0].mxu0
      %v1772 = vadd.f32 %v1664, %v1771
      %v1773 = vpop.f32.mrb[0].mxu0
      %1774 = vmatprep.mubr.f32.mxu0 0.0
      %1775 = vmatmul.mubr.f32.gmra.mrb[0].mxu0 %v1679
      %v1776 = vpop.f32.mrb[0].mxu0
      %v1777 = vadd.f32 %v1664, %v1776
      %v1778 = vpop.f32.mrb[0].mxu0
      %1779 = vmatprep.mubr.f32.mxu0 0.0
      %1780 = vmatmul.mubr.f32.gmra.mrb[0].mxu0 %v1682
      %v1781 = vpop.f32.mrb[0].mxu0
      %v1782 = vadd.f32 %v1664, %v1781
      %v1783 = vpop.f32.mrb[0].mxu0
      %1784 = vmatprep.mubr.f32.mxu0 0.0
      %1785 = vmatmul.mubr.f32.gmra.mrb[0].mxu0 %v1685
      %v1786 = vpop.f32.mrb[0].mxu0
      %v1787 = vadd.f32 %v1664, %v1786
      %v1788 = vpop.f32.mrb[0].mxu0
      %1789 = vmatprep.mubr.f32.mxu0 0.0
      %1790 = vmatmul.mubr.f32.gmra.mrb[0].mxu0 %v1688
      %v1791 = vpop.f32.mrb[0].mxu0
      %v1792 = vadd.f32 %v1664, %v1791
      %v1793 = vpop.f32.mrb[0].mxu0
      %1794 = vdwg.mxu0
      %v1795 = vsel %vm620, %v1757, 0.0
      %1796 = vadd.xlane.f32.xlu0 %v1795
      %v1797 = vpop.xlane.xlu0 %1796
      %v1798 = vsel %vm620, %v1762, 0.0
      %1799 = vadd.xlane.f32.xlu0 %v1798
      %v1800 = vpop.xlane.xlu0 %1799
      %v1801 = vsel %vm620, %v1767, 0.0
      %1802 = vadd.xlane.f32.xlu0 %v1801
      %v1803 = vpop.xlane.xlu0 %1802
      %v1804 = vsel %vm620, %v1772, 0.0
      %1805 = vadd.xlane.f32.xlu0 %v1804
      %v1806 = vpop.xlane.xlu0 %1805
      %v1807 = vsel %vm620, %v1777, 0.0
      %1808 = vadd.xlane.f32.xlu0 %v1807
      %v1809 = vpop.xlane.xlu0 %1808
      %v1810 = vsel %vm620, %v1782, 0.0
      %1811 = vadd.xlane.f32.xlu0 %v1810
      %v1812 = vpop.xlane.xlu0 %1811
      %v1813 = vsel %vm620, %v1787, 0.0
      %1814 = vadd.xlane.f32.xlu0 %v1813
      %v1815 = vpop.xlane.xlu0 %1814
      %v1816 = vsel %vm620, %v1792, 0.0
      %1817 = vadd.xlane.f32.xlu0 %v1816
      %v1818 = vpop.xlane.xlu0 %1817
      %v1819 = vrcp.pop 32.0
      %v1820 = vmul.f32 %v1797, %v1819
      %v1821 = vmul.f32 %v1800, %v1819
      %v1822 = vmul.f32 %v1803, %v1819
      %v1823 = vmul.f32 %v1806, %v1819
      %v1824 = vmul.f32 %v1809, %v1819
      %v1825 = vmul.f32 %v1812, %v1819
      %v1826 = vmul.f32 %v1815, %v1819
      %v1827 = vmul.f32 %v1818, %v1819
      %v1828 = vsub.f32 %v1757, %v1820
      %v1829 = vsub.f32 %v1762, %v1821
      %v1830 = vsub.f32 %v1767, %v1822
      %v1831 = vsub.f32 %v1772, %v1823
      %v1832 = vsub.f32 %v1777, %v1824
      %v1833 = vsub.f32 %v1782, %v1825
      %v1834 = vsub.f32 %v1787, %v1826
      %v1835 = vsub.f32 %v1792, %v1827
      %v1836 = vmul.f32 %v1828, %v1828
      %v1837 = vmul.f32 %v1829, %v1829
      %v1838 = vmul.f32 %v1830, %v1830
      %v1839 = vmul.f32 %v1831, %v1831
      %v1840 = vmul.f32 %v1832, %v1832
      %v1841 = vmul.f32 %v1833, %v1833
      %v1842 = vmul.f32 %v1834, %v1834
      %v1843 = vmul.f32 %v1835, %v1835
      %v1844 = vsel %vm620, %v1836, 0.0
      %1845 = vadd.xlane.f32.xlu0 %v1844
      %v1846 = vpop.xlane.xlu0 %1845
      %v1847 = vsel %vm620, %v1837, 0.0
      %1848 = vadd.xlane.f32.xlu0 %v1847
      %v1849 = vpop.xlane.xlu0 %1848
      %v1850 = vsel %vm620, %v1838, 0.0
      %1851 = vadd.xlane.f32.xlu0 %v1850
      %v1852 = vpop.xlane.xlu0 %1851
      %v1853 = vsel %vm620, %v1839, 0.0
      %1854 = vadd.xlane.f32.xlu0 %v1853
      %v1855 = vpop.xlane.xlu0 %1854
      %v1856 = vsel %vm620, %v1840, 0.0
      %1857 = vadd.xlane.f32.xlu0 %v1856
      %v1858 = vpop.xlane.xlu0 %1857
      %v1859 = vsel %vm620, %v1841, 0.0
      %1860 = vadd.xlane.f32.xlu0 %v1859
      %v1861 = vpop.xlane.xlu0 %1860
      %v1862 = vsel %vm620, %v1842, 0.0
      %1863 = vadd.xlane.f32.xlu0 %v1862
      %v1864 = vpop.xlane.xlu0 %1863
      %v1865 = vsel %vm620, %v1843, 0.0
      %1866 = vadd.xlane.f32.xlu0 %v1865
      %v1867 = vpop.xlane.xlu0 %1866
      %v1868 = vmul.f32 %v1846, %v1819
      %v1869 = vmul.f32 %v1849, %v1819
      %v1870 = vmul.f32 %v1852, %v1819
      %v1871 = vmul.f32 %v1855, %v1819
      %v1872 = vmul.f32 %v1858, %v1819
      %v1873 = vmul.f32 %v1861, %v1819
      %v1874 = vmul.f32 %v1864, %v1819
      %v1875 = vmul.f32 %v1867, %v1819
      %v1876 = vadd.f32 %v1868, 1e-05
      %v1877 = vadd.f32 %v1869, 1e-05
      %v1878 = vadd.f32 %v1870, 1e-05
      %v1879 = vadd.f32 %v1871, 1e-05
      %v1880 = vadd.f32 %v1872, 1e-05
      %v1881 = vadd.f32 %v1873, 1e-05
      %v1882 = vadd.f32 %v1874, 1e-05
      %v1883 = vadd.f32 %v1875, 1e-05
      %v1884 = vrsqrt.pop %v1876
      %v1885 = vrsqrt.pop %v1877
      %v1886 = vrsqrt.pop %v1878
      %v1887 = vrsqrt.pop %v1879
      %v1888 = vrsqrt.pop %v1880
      %v1889 = vrsqrt.pop %v1881
      %v1890 = vrsqrt.pop %v1882
      %v1891 = vrsqrt.pop %v1883
      %v1892 = vmul.f32 %v1828, %v1884
      %v1893 = vmul.f32 %v1829, %v1885
      %v1894 = vmul.f32 %v1830, %v1886
      %v1895 = vmul.f32 %v1831, %v1887
      %v1896 = vmul.f32 %v1832, %v1888
      %v1897 = vmul.f32 %v1833, %v1889
      %v1898 = vmul.f32 %v1834, %v1890
      %v1899 = vmul.f32 %v1835, %v1891
      %v1900 = vld [vmem:[%s13] sm:$0x1]
      %v1902 = vlaneseq
      %v1903 = vshrl.u32 %v1902, 7
      %v1904 = vsub.s32 0, %v1903
      %v1905 = vrot.slane %v1900, %v1904
      %v1907 = vmul.f32 %v1892, %v1905
      %v1908 = vmul.f32 %v1893, %v1905
      %v1909 = vmul.f32 %v1894, %v1905
      %v1910 = vmul.f32 %v1895, %v1905
      %v1911 = vmul.f32 %v1896, %v1905
      %v1912 = vmul.f32 %v1897, %v1905
      %v1913 = vmul.f32 %v1898, %v1905
      %v1914 = vmul.f32 %v1899, %v1905
      %v1915 = vld [vmem:[%s14] sm:$0x1]
      %v1917 = vlaneseq
      %v1918 = vshrl.u32 %v1917, 7
      %v1919 = vsub.s32 0, %v1918
      %v1920 = vrot.slane %v1915, %v1919
      %v1922 = vadd.f32 %v1907, %v1920
      %v1923 = vadd.f32 %v1908, %v1920
      %v1924 = vadd.f32 %v1909, %v1920
      %v1925 = vadd.f32 %v1910, %v1920
      %v1926 = vadd.f32 %v1911, %v1920
      %v1927 = vadd.f32 %v1912, %v1920
      %v1928 = vadd.f32 %v1913, %v1920
      %v1929 = vadd.f32 %v1914, %v1920
      %1930 = vst.msk [vmem:[%s565] sm:$0xff] %vm620, %v1922
      %1931 = vst.msk [vmem:[%s565 + $0x8] sm:$0xff] %vm620, %v1923
      %1932 = vst.msk [vmem:[%s565 + $0x10] sm:$0xff] %vm620, %v1924
      %1933 = vst.msk [vmem:[%s565 + $0x18] sm:$0xff] %vm620, %v1925
      %1934 = vst.msk [vmem:[%s565 + $0x20] sm:$0xff] %vm620, %v1926
      %1935 = vst.msk [vmem:[%s565 + $0x28] sm:$0xff] %vm620, %v1927
      %1936 = vst.msk [vmem:[%s565 + $0x30] sm:$0xff] %vm620, %v1928
      %1937 = vst.msk [vmem:[%s565 + $0x38] sm:$0xff] %vm620, %v1929
      %v1938 = vcvt.s32.f32 %v1195
      %v1940 = vsel %vm1196, %v1938, 0
      %1942 = vmatprep.subr.mxu0 0.0
      %1943 = vmatpush1.xpose.msra.mxu0 %v1382
      %1944 = vmatprep.subr.mxu0 0.0
      %1945 = vmatpush1.xpose.msra.mxu0 %v1385
      %1946 = vmatprep.subr.mxu0 0.0
      %1947 = vmatpush1.xpose.msra.mxu0 %v1388
      %1948 = vmatprep.subr.mxu0 0.0
      %1949 = vmatpush1.xpose.msra.mxu0 %v1391
      %1950 = vmatprep.subr.mxu0 0.0
      %1951 = vmatpush1.xpose.msra.mxu0 %v1394
      %1952 = vmatprep.subr.mxu0 0.0
      %1953 = vmatpush1.xpose.msra.mxu0 %v1397
      %1954 = vmatprep.subr.mxu0 0.0
      %1955 = vmatpush1.xpose.msra.mxu0 %v1400
      %1956 = vmatprep.subr.mxu0 0.0
      %1957 = vmatpush1.xpose.msra.mxu0 %v1403
      %1958 = vmatprep.subr.mxu0 0.0
      %1959 = vmatpush1.xpose.msra.mxu0 0.0
      %1960 = vmatprep.subr.mxu0 0.0
      %1961 = vmatpush1.xpose.msra.mxu0 0.0
      %1962 = vmatprep.subr.mxu0 0.0
      %1963 = vmatpush1.xpose.msra.mxu0 0.0
      %1964 = vmatprep.subr.mxu0 0.0
      %1965 = vmatpush1.xpose.msra.mxu0 0.0
      %1966 = vmatprep.subr.mxu0 0.0
      %1967 = vmatpush1.xpose.msra.mxu0 0.0
      %1968 = vmatprep.subr.mxu0 0.0
      %1969 = vmatpush1.xpose.msra.mxu0 0.0
      %1970 = vmatprep.subr.mxu0 0.0
      %1971 = vmatpush1.xpose.msra.mxu0 0.0
      %1972 = vmatprep.subr.mxu0 0.0
      %1973 = vmatpush1.xpose.msra.mxu0 0.0
      %1974 = vmatprep.subr.mxu0 0.0
      %1975 = vmatpush1.xpose.msra.mxu0 0.0
      %1976 = vmatprep.subr.mxu0 0.0
      %1977 = vmatpush1.xpose.msra.mxu0 0.0
      %1978 = vmatprep.subr.mxu0 0.0
      %1979 = vmatpush1.xpose.msra.mxu0 0.0
      %1980 = vmatprep.subr.mxu0 0.0
      %1981 = vmatpush1.xpose.msra.mxu0 0.0
      %1982 = vmatprep.subr.mxu0 0.0
      %1983 = vmatpush1.xpose.msra.mxu0 0.0
      %1984 = vmatprep.subr.mxu0 0.0
      %1985 = vmatpush1.xpose.msra.mxu0 0.0
      %1986 = vmatprep.subr.mxu0 0.0
      %1987 = vmatpush1.xpose.msra.mxu0 0.0
      %1988 = vmatprep.subr.mxu0 0.0
      %1989 = vmatpush1.xpose.msra.mxu0 0.0
      %1990 = vmatprep.subr.mxu0 0.0
      %1991 = vmatpush1.xpose.msra.mxu0 0.0
      %1992 = vmatprep.subr.mxu0 0.0
      %1993 = vmatpush1.xpose.msra.mxu0 0.0
      %1994 = vmatprep.subr.mxu0 0.0
      %1995 = vmatpush1.xpose.msra.mxu0 0.0
      %1996 = vmatprep.subr.mxu0 0.0
      %1997 = vmatpush1.xpose.msra.mxu0 0.0
      %1998 = vmatprep.subr.mxu0 0.0
      %1999 = vmatpush1.xpose.msra.mxu0 0.0
      %2000 = vmatprep.subr.mxu0 0.0
      %2001 = vmatpush1.xpose.msra.mxu0 0.0
      %2002 = vmatprep.subr.mxu0 0.0
      %2003 = vmatpush1.xpose.msra.mxu0 0.0
      %2004 = vmatprep.subr.mxu0 0.0
      %2005 = vmatpush1.xpose.msra.mxu0 0.0
      %2006 = vmatprep.mubr.f32.mxu0 0.0
      %2007 = vmatmul.mubr.f32.gmra.mrb[0].mxu0 %v1940
      %v2008 = vpop.f32.mrb[0].mxu0
      %v2009 = vadd.f32 0.0, %v2008
      %v2010 = vpop.f32.mrb[0].mxu0
      %2011 = vdwg.mxu0
      %v2012 = vcvt.f32.s32.to.zero.pseudo %v2009
      %vm2013 = vcmask 516096
      %2014 = vst.msk [vmem:[%s572] sm:$0x1] %vm2013, %v2012
      %s2015 = smul.u32 8, %s33
      %p2016 = scmp.lt.s32.totalorder %s32, 1
      %s2017 = scalar_select %p2016, %s32, 1
      %p2018 = scmp.lt.s32.totalorder %s2015, 7
      %s2019 = scalar_select %p2018, %s2015, 7
      %s2020 = smul.addr %s2017, 8
      %s2021 = sadd.s32 %s2019, %s2020
      %s2022 = smul.addr %s2021, 8
      %s2023 = scalar_lea.vmem %s15, %s2022
      %p2024 = scmp.lt.s32.totalorder %s32, 1
      %s2025 = scalar_select %p2024, %s32, 1
      %p2026 = scmp.lt.s32.totalorder %s33, 0
      %s2027 = scalar_select %p2026, %s33, 0
      %s2028 = sadd.s32 %s2027, %s2025
      %s2029 = scalar_lea.vmem %s16, %s2028
      // Predicated region
      $region81: #{base_vq_forward.1} parent=79 // pred_check
        %p2030 = pneg %p382
      $region82: #{base_vq_forward.1} parent=79 // pred_check_branch
        %2032 = sbr.rel (%p2030) target = $region84
      $region83: #{base_vq_forward.1} parent=79 // pred_region
        %s2033 = smul.u32 8, %s33
      $region84: #{base_vq_forward.1} parent=79 // pred_fallthru
        _
      // Predicated region
      $region85: #{base_vq_forward.1} parent=79 // pred_check
        %p2034 = pneg %p410
      $region86: #{base_vq_forward.1} parent=79 // pred_check_branch
        %2036 = sbr.rel (%p2034) target = $region88
      $region87: #{base_vq_forward.1} parent=79 // pred_region
        _
      $region88: #{base_vq_forward.1} parent=79 // pred_fallthru
        _
    $region80: #{base_vq_forward.1} parent=5 // pred_fallthru
      _
    %p2037 = scmp.le.s32.totalorder 2, %s23
    // Predicated region
    $region89: #{base_vq_forward.1} parent=5 // pred_check
      %p2038 = pneg %p2037
    $region90: #{base_vq_forward.1} parent=5 // pred_check_branch
      %2040 = sbr.rel (%p2038) target = $region92
    $region91: #{base_vq_forward.1} parent=5 // pred_region
      %s2041 = ssub.s32 %s23, 2
      // Predicated region
      $region93: #{base_vq_forward.1} parent=91 // pred_check
        %p2042 = pneg %p388
      $region94: #{base_vq_forward.1} parent=91 // pred_check_branch
        %2044 = sbr.rel (%p2042) target = $region96
      $region95: #{base_vq_forward.1} parent=91 // pred_region
        %s2045 = smul.u32 8, %s35
        %p2046 = scmp.lt.s32.totalorder %s34, 1
        %s2047 = scalar_select %p2046, %s34, 1
        %p2048 = scmp.lt.s32.totalorder %s2045, 7
        %s2049 = scalar_select %p2048, %s2045, 7
        %s2050 = smul.addr %s2047, 8
        %s2051 = sadd.s32 %s2049, %s2050
        %s2052 = smul.addr %s2051, 8
        %s2053 = scalar_lea.vmem %s15, %s2052
      $region96: #{base_vq_forward.1} parent=91 // pred_fallthru
        _
      // Predicated region
      $region97: #{base_vq_forward.1} parent=91 // pred_check
        %p2054 = pneg %p416
      $region98: #{base_vq_forward.1} parent=91 // pred_check_branch
        %2056 = sbr.rel (%p2054) target = $region100
      $region99: #{base_vq_forward.1} parent=91 // pred_region
        %p2057 = scmp.lt.s32.totalorder %s34, 1
        %s2058 = scalar_select %p2057, %s34, 1
        %p2059 = scmp.lt.s32.totalorder %s35, 0
        %s2060 = scalar_select %p2059, %s35, 0
        %s2061 = sadd.s32 %s2060, %s2058
        %s2062 = scalar_lea.vmem %s16, %s2061
      $region100: #{base_vq_forward.1} parent=91 // pred_fallthru
        _
    $region92: #{base_vq_forward.1} parent=5 // pred_fallthru
      _
  $region6: #{base_vq_forward.1} parent=0 // loop_footer
    %s27 = sadd.s32 1, %s23
  $region7: #{base_vq_forward.1} parent=0 // loop_footer_branch
    %22 = sbr.rel target = $region3
  $region8: #{base_vq_forward.1} parent=0 // loop_exit
    _

</llo_original>
